<compile_context>
chip_gen: v7x
topology: tpu7x:2x2x1
jax: 0.10.0
libtpu: 0.0.40
codegen_flags: <defaults>
</compile_context>

<pallas_src>
import functools
import math

import numpy as np
import jax
import jax.numpy as jnp
from jax import lax
from jax.experimental import pallas as pl
from jax.experimental.pallas import tpu as pltpu


def _mh_state_encoder_kernel(x_ref, colinfo_ref, amcol_ref, rowb_ref,
                             w1_ref, wqkv_ref, wo_ref, bo_ref,
                             srep_ref, hm_ref, scomb_ref,
                             out_ref, *, atten_dim):
    """One grid step = TB batch elements, fully fused."""
    x = x_ref[0]                          # (TB*N, input_dim+1), ones column appended
    ci = colinfo_ref[0]                   # (2, Rk): row0 = key-col local batch id,
                                          #          row1 = scenario mask per key col
    colb = ci[0:1, :]                     # (1, Rk)
    smc = ci[1:2, :]                      # (1, Rk)
    rowb = rowb_ref[...]                  # (Rq, 1) local batch id per score row
    amcol = amcol_ref[0]                  # (TB*A, 1) agent mask (nonzero -> zero output)

    # fc_states (+ folded bias); last output column carries the "1" forward.
    embed = jnp.maximum(
        jnp.dot(x, w1_ref[...], preferred_element_type=jnp.float32), 0.0)    # (TB*N, H+1)

    # Fused q/k/v projection; biases folded through the carried ones column.
    # 1/sqrt(head_dim) is pre-folded into the wq/bq columns.
    qkv = jnp.dot(embed, wqkv_ref[...], preferred_element_type=jnp.float32)  # (TB*N, 3*atten)
    q = qkv[:, :atten_dim]
    k = qkv[:, atten_dim:2 * atten_dim]
    v = jnp.maximum(qkv[:, 2 * atten_dim:], 0.0)

    # Expand q to one row per (batch, agent, head); hm keeps only that head's lanes.
    q_exp = jnp.dot(srep_ref[...], q,
                    preferred_element_type=jnp.float32) * hm_ref[...]        # (Rq, atten)

    # All (batch, agent, head) scores in a single MXU push.
    scores = lax.dot_general(q_exp, k, (((1,), (1,)), ((), ())),
                             preferred_element_type=jnp.float32)             # (Rq, Rk)

    # Mask built in-kernel from tiny 1-D streams: kill cross-batch entries and
    # masked key entities.  (Per-row agent masking is unnecessary for the final
    # output: those rows are zeroed after the out projection — identical result.)
    masked = jnp.logical_or(rowb != colb, smc != 0.0)                        # (Rq, Rk)
    scores = jnp.where(masked, -jnp.inf, scores)

    # Masked softmax reproducing torch masked_fill(-inf) + NaN->0.
    rmax = jnp.max(scores, axis=-1, keepdims=True)
    rmax = jnp.where(rmax == -jnp.inf, 0.0, rmax)
    p = jnp.exp(scores - rmax)                # exp(-inf) == 0 exactly on masked lanes
    den = jnp.sum(p, axis=-1, keepdims=True)
    den_safe = jnp.where(den > 0.0, den, 1.0)
    # approx=True (EUP vrcp) breaks the 1e-5 tolerance, keep exact reciprocal.
    w = p * pl.reciprocal(den_safe, approx=False)   # fully-masked rows stay all-zero

    # Per-(b,a,h) attention output, keep that head's lanes, recombine heads
    # with a 0/1 matmul -> per-agent concatenated heads.
    ctx = jnp.dot(w, v, preferred_element_type=jnp.float32) * hm_ref[...]    # (Rq, atten)
    atten = jnp.dot(scomb_ref[...], ctx,
                    preferred_element_type=jnp.float32)                      # (TB*A, atten)

    # Output projection into a lane-dense (TB*A, HP) slab (HP = H padded to 128),
    # out-bias added, masked agents zeroed (finishes the masked_fill).
    y = jnp.dot(atten, wo_ref[...], preferred_element_type=jnp.float32) + bo_ref[...]
    y = jnp.where(amcol != 0.0, 0.0, y)
    out_ref[0] = y


def _choose_tiles(B, A, n_heads, *, max_rows_per_step=1024):
    """Pick (grid steps G, per-step batch tile TB); B is padded up to G*TB.

    The grid is a sequential loop on single-TensorCore v5e/v6e, so the whole
    batch stays in one step unless the per-step score-row count gets large —
    only then does splitting help (feeds both v7x TensorCores) and it also
    bounds the TB^2-sized structural constants' VMEM footprint.
    """
    rows_per_batch = A * n_heads
    if B * rows_per_batch <= max_rows_per_step:
        return 1, B
    tb = max(1, max_rows_per_step // rows_per_batch)
    g = -(-B // tb)
    return g, tb


def multi_head_state_inp_encoder(inputs, scenario_masks, params, *, n_agents, n_heads):
    bs, t, n_entities, input_dim = inputs.shape
    B = bs * t
    A, N = n_agents, n_entities
    H = params["w1"].shape[0]            # rnn_hidden_dim
    atten_dim = params["wq"].shape[0]
    assert atten_dim % n_heads == 0
    head_dim = atten_dim // n_heads
    f32 = jnp.float32

    G, TB = _choose_tiles(B, A, n_heads)
    Bp = G * TB                          # padded batch (pad rows are fully masked)
    Rq = TB * A * n_heads                # one score row per (batch, agent, head)
    Rk = TB * N                          # one key/value row per (batch, entity)
    IN1 = input_dim + 1
    HP = -(-H // 128) * 128              # lane-dense output width

    # ---------------- data prep (tiny glue; the big (Rq,Rk) mask and the
    # (TB*A,H) bias tensor are now built inside the kernel) ----------------
    x2 = inputs.reshape(B, N, input_dim).astype(f32)
    sm = scenario_masks.reshape(B, N).astype(f32)
    if Bp != B:
        x2 = jnp.concatenate([x2, jnp.zeros((Bp - B, N, input_dim), f32)], axis=0)
        sm = jnp.concatenate([sm, jnp.ones((Bp - B, N), f32)], axis=0)  # pad = masked
    x_aug = jnp.concatenate([x2.reshape(Bp * N, input_dim),
                             jnp.ones((Bp * N, 1), f32)], axis=-1)
    x3 = x_aug.reshape(G, TB * N, IN1)

    am_col = sm[:, :A].reshape(G, TB * A, 1)                      # agent mask per out row
    colb_np = np.repeat(np.arange(TB, dtype=np.float32), N)       # key col -> local batch
    colinfo = jnp.concatenate(
        [jnp.broadcast_to(jnp.asarray(colb_np, f32)[None, None, :], (G, 1, Rk)),
         sm.reshape(G, 1, Rk)], axis=1)                            # (G, 2, Rk)
    rowb = jnp.asarray(
        np.repeat(np.arange(TB, dtype=np.float32), A * n_heads)[:, None], f32)  # (Rq, 1)

    # ---------------- parameter packing (once per call) ----------------
    w1t = params["w1"].T.astype(f32)                               # (in, H)
    b1 = params["b1"].reshape(1, -1).astype(f32)
    w1_aug = jnp.concatenate([
        jnp.concatenate([w1t, jnp.zeros((input_dim, 1), f32)], axis=1),
        jnp.concatenate([b1, jnp.ones((1, 1), f32)], axis=1)], axis=0)       # (in+1, H+1)

    scale = 1.0 / math.sqrt(head_dim)    # folded into wq/bq so structural mats stay 0/1
    wqkv = jnp.concatenate([params["wq"].T.astype(f32) * scale,
                            params["wk"].T.astype(f32),
                            params["wv"].T.astype(f32)], axis=1)             # (H, 3*atten)
    bqkv = jnp.concatenate([params["bq"].astype(f32) * scale,
                            params["bk"].astype(f32),
                            params["bv"].astype(f32)]).reshape(1, -1)
    wqkv_aug = jnp.concatenate([wqkv, bqkv], axis=0)                         # (H+1, 3*atten)

    wo_pad = jnp.zeros((atten_dim, HP), f32).at[:, :H].set(params["wo"].T.astype(f32))
    bo_pad = jnp.zeros((1, HP), f32).at[:, :H].set(params["bo"].reshape(1, -1).astype(f32))

    # ---------------- structural 0/1 constants ----------------
    r = np.arange(Rq)
    b_r = r // (A * n_heads)
    a_r = (r // n_heads) % A
    h_r = r % n_heads
    c = np.arange(Rk)
    s_rep = jnp.asarray(c[None, :] == (b_r * N + a_r)[:, None], dtype=f32)     # (Rq, Rk)
    hm_rows = jnp.asarray(
        (np.arange(atten_dim)[None, :] // head_dim) == h_r[:, None], dtype=f32)  # (Rq, atten)
    m = np.arange(TB * A)
    s_comb = jnp.asarray((r[None, :] // n_heads) == m[:, None], dtype=f32)     # (TB*A, Rq)

    # ---------------- specs / cost ----------------
    def const_spec(shape):
        return pl.BlockSpec(shape, lambda g, _n=len(shape): (0,) * _n)

    kernel = functools.partial(_mh_state_encoder_kernel, atten_dim=atten_dim)

    grid_spec = pltpu.PrefetchScalarGridSpec(
        num_scalar_prefetch=0,
        grid=(G,),
        in_specs=[
            pl.BlockSpec((1, TB * N, IN1), lambda g: (g, 0, 0)),
            pl.BlockSpec((1, 2, Rk), lambda g: (g, 0, 0)),
            pl.BlockSpec((1, TB * A, 1), lambda g: (g, 0, 0)),
            const_spec((Rq, 1)),
            const_spec((IN1, H + 1)),
            const_spec((H + 1, 3 * atten_dim)),
            const_spec((atten_dim, HP)),
            const_spec((1, HP)),
            const_spec((Rq, Rk)),
            const_spec((Rq, atten_dim)),
            const_spec((TB * A, Rq)),
        ],
        out_specs=pl.BlockSpec((1, TB * A, HP), lambda g: (g, 0, 0)),
    )

    step_bytes = 4 * (TB * N * IN1 + 2 * Rk + TB * A + TB * A * HP)
    const_bytes = 4 * (Rq + IN1 * (H + 1) + (H + 1) * 3 * atten_dim
                       + atten_dim * HP + HP + Rq * Rk + Rq * atten_dim + TB * A * Rq)
    flops = 2 * G * (TB * N * IN1 * (H + 1) + TB * N * (H + 1) * 3 * atten_dim
                     + 3 * Rq * Rk * atten_dim
                     + TB * A * Rq * atten_dim + TB * A * atten_dim * HP)
    cost = pl.CostEstimate(flops=int(flops), transcendentals=int(G * Rq * Rk),
                           bytes_accessed=int(G * step_bytes + const_bytes))

    vmem_est = 2 * step_bytes + const_bytes          # per-step blocks double-buffered
    vmem_limit = None
    if vmem_est > 12 * 1024 * 1024:                  # only override when defaults are tight
        vmem_limit = int(min(max(2 * vmem_est, 32 * 1024 * 1024), 60 * 1024 * 1024))

    out = pl.pallas_call(
        kernel,
        out_shape=jax.ShapeDtypeStruct((G, TB * A, HP), f32),
        grid_spec=grid_spec,
        compiler_params=pltpu.CompilerParams(
            dimension_semantics=("parallel",),
            vmem_limit_bytes=vmem_limit),
        cost_estimate=cost,
    )(x3, colinfo, am_col, rowb, w1_aug, wqkv_aug, wo_pad, bo_pad,
      s_rep, hm_rows, s_comb)

    y = out.reshape(Bp, A, HP)[:B, :, :H]
    return y.reshape(bs, t, A, H)


def reference(inputs, scenario_masks, P, *, n_agents, n_heads):
    """Pure-JAX transcription of the PyTorch forward, for correctness check."""
    bs, t, n_entities, input_dim = inputs.shape
    B = bs * t
    x = inputs.reshape(B, n_entities, input_dim).astype(jnp.float32)
    sm = scenario_masks.reshape(B, n_entities).astype(jnp.float32)

    embed = jax.nn.relu(x @ P["w1"].T + P["b1"])
    q = embed @ P["wq"].T + P["bq"]
    k = embed @ P["wk"].T + P["bk"]
    v = jax.nn.relu(embed @ P["wv"].T + P["bv"])

    atten_dim = q.shape[-1]
    e = atten_dim // n_heads
    am = sm[:, :n_agents]
    atten_mask = 1.0 - (1.0 - am)[:, :, None] * (1.0 - sm)[:, None, :]  # (B, A, N)

    qh = q.reshape(B, n_entities, n_heads, e)[:, :n_agents]
    kh = k.reshape(B, n_entities, n_heads, e)
    vh = v.reshape(B, n_entities, n_heads, e)

    score = jnp.einsum("bahe,bnhe->bhan", qh, kh) / jnp.sqrt(jnp.float32(e))
    score = jnp.where(atten_mask[:, None] != 0.0, -jnp.inf, score)
    w = jax.nn.softmax(score, axis=-1)
    w = jnp.where(jnp.isnan(w), 0.0, w)

    ao = jnp.einsum("bhan,bnhe->bahe", w, vh).reshape(B, n_agents, atten_dim)
    y = ao @ P["wo"].T + P["bo"]
    y = jnp.where(am[:, :, None] != 0.0, 0.0, y)
    return y.reshape(bs, t, n_agents, -1)


if __name__ == "__main__":
    # args: n_agents=3, n_entities=6, local_state_size=10, obs_last_action=False,
    #       rnn_hidden_dim=32, n_heads=4, atten_dim=32
    bs, t = 2, 4
    n_entities, n_agents = 6, 3
    local_state_size = 10
    rnn_hidden_dim = 32
    n_heads = 4
    atten_dim = 32
    input_dim = local_state_size  # obs_last_action = False

    key = jax.random.PRNGKey(0)
    keys = jax.random.split(key, 12)
    s = 0.1
    P = {
        "w1": s * jax.random.normal(keys[0], (rnn_hidden_dim, input_dim), jnp.float32),
        "b1": s * jax.random.normal(keys[1], (rnn_hidden_dim,), jnp.float32),
        "wq": s * jax.random.normal(keys[2], (atten_dim, rnn_hidden_dim), jnp.float32),
        "bq": s * jax.random.normal(keys[3], (atten_dim,), jnp.float32),
        "wk": s * jax.random.normal(keys[4], (atten_dim, rnn_hidden_dim), jnp.float32),
        "bk": s * jax.random.normal(keys[5], (atten_dim,), jnp.float32),
        "wv": s * jax.random.normal(keys[6], (atten_dim, rnn_hidden_dim), jnp.float32),
        "bv": s * jax.random.normal(keys[7], (atten_dim,), jnp.float32),
        "wo": s * jax.random.normal(keys[8], (rnn_hidden_dim, atten_dim), jnp.float32),
        "bo": s * jax.random.normal(keys[9], (rnn_hidden_dim,), jnp.float32),
    }
    inputs = jax.random.normal(keys[10], (bs, t, n_entities, input_dim), jnp.float32)
    scenario_masks = jax.random.bernoulli(
        keys[11], 0.3, (bs, t, n_entities)).astype(jnp.float32)

    out = multi_head_state_inp_encoder(
        inputs, scenario_masks, P, n_agents=n_agents, n_heads=n_heads)
    out = jax.block_until_ready(out)

    ref = reference(inputs, scenario_masks, P, n_agents=n_agents, n_heads=n_heads)
    assert out.shape == (bs, t, n_agents, rnn_hidden_dim), out.shape
    max_err = float(jnp.max(jnp.abs(out - ref)))
    assert jnp.allclose(out, ref, atol=1e-5, rtol=1e-5), f"max_err={max_err}"
    print("KERNEL_OK")
</pallas_src>

<mosaic_0001>
module attributes {stable_mosaic.version = 11 : i64} {
  func.func @_mh_state_encoder_kernel(%arg0: i32, %arg1: memref<1x48x11xf32, #tpu.memory_space<vmem>>, %arg2: memref<1x2x48xf32, #tpu.memory_space<vmem>>, %arg3: memref<1x24x1xf32, #tpu.memory_space<vmem>>, %arg4: memref<96x1xf32, #tpu.memory_space<vmem>>, %arg5: memref<11x33xf32, #tpu.memory_space<vmem>>, %arg6: memref<33x96xf32, #tpu.memory_space<vmem>>, %arg7: memref<32x128xf32, #tpu.memory_space<vmem>>, %arg8: memref<1x128xf32, #tpu.memory_space<vmem>>, %arg9: memref<96x48xf32, #tpu.memory_space<vmem>>, %arg10: memref<96x32xf32, #tpu.memory_space<vmem>>, %arg11: memref<24x96xf32, #tpu.memory_space<vmem>>, %arg12: memref<1x24x128xf32, #tpu.memory_space<vmem>>) attributes {dimension_semantics = [#tpu.dimension_semantics<parallel>], iteration_bounds = array<i64: 1>, scalar_prefetch = 0 : i64, scratch_operands = 0 : i64, tpu.core_type = #tpu.core_type<tc>, window_params = [{transform_indices = @transform_0, window_bounds = array<i64: 1, 48, 11>}, {transform_indices = @transform_1, window_bounds = array<i64: 1, 2, 48>}, {transform_indices = @transform_2, window_bounds = array<i64: 1, 24, 1>}, {pipeline_mode = #tpu.pipeline_mode<synchronous>, transform_indices = @transform_3, window_bounds = array<i64: 96, 1>}, {pipeline_mode = #tpu.pipeline_mode<synchronous>, transform_indices = @transform_4, window_bounds = array<i64: 11, 33>}, {pipeline_mode = #tpu.pipeline_mode<synchronous>, transform_indices = @transform_5, window_bounds = array<i64: 33, 96>}, {pipeline_mode = #tpu.pipeline_mode<synchronous>, transform_indices = @transform_6, window_bounds = array<i64: 32, 128>}, {pipeline_mode = #tpu.pipeline_mode<synchronous>, transform_indices = @transform_7, window_bounds = array<i64: 1, 128>}, {pipeline_mode = #tpu.pipeline_mode<synchronous>, transform_indices = @transform_8, window_bounds = array<i64: 96, 48>}, {pipeline_mode = #tpu.pipeline_mode<synchronous>, transform_indices = @transform_9, window_bounds = array<i64: 96, 32>}, {pipeline_mode = #tpu.pipeline_mode<synchronous>, transform_indices = @transform_10, window_bounds = array<i64: 24, 96>}, {transform_indices = @transform_11, window_bounds = array<i64: 1, 24, 128>}]} {
    %c0 = arith.constant 0 : index
    %c0_0 = arith.constant 0 : index
    %c0_1 = arith.constant 0 : index
    %0 = vector.load %arg1[%c0, %c0_0, %c0_1] : memref<1x48x11xf32, #tpu.memory_space<vmem>>, vector<1x48x11xf32>
    %1 = vector.shape_cast %0 : vector<1x48x11xf32> to vector<48x11xf32>
    %c0_2 = arith.constant 0 : index
    %c0_3 = arith.constant 0 : index
    %c0_4 = arith.constant 0 : index
    %2 = vector.load %arg2[%c0_2, %c0_3, %c0_4] : memref<1x2x48xf32, #tpu.memory_space<vmem>>, vector<1x2x48xf32>
    %3 = vector.shape_cast %2 : vector<1x2x48xf32> to vector<2x48xf32>
    %4 = vector.extract_strided_slice %3 {offsets = [0, 0], sizes = [1, 48], strides = [1, 1]} : vector<2x48xf32> to vector<1x48xf32>
    %5 = vector.extract_strided_slice %3 {offsets = [1, 0], sizes = [1, 48], strides = [1, 1]} : vector<2x48xf32> to vector<1x48xf32>
    %c0_5 = arith.constant 0 : index
    %c0_6 = arith.constant 0 : index
    %6 = vector.load %arg4[%c0_5, %c0_6] : memref<96x1xf32, #tpu.memory_space<vmem>>, vector<96x1xf32>
    %c0_7 = arith.constant 0 : index
    %c0_8 = arith.constant 0 : index
    %c0_9 = arith.constant 0 : index
    %7 = vector.load %arg3[%c0_7, %c0_8, %c0_9] : memref<1x24x1xf32, #tpu.memory_space<vmem>>, vector<1x24x1xf32>
    %8 = vector.shape_cast %7 : vector<1x24x1xf32> to vector<24x1xf32>
    %c0_10 = arith.constant 0 : index
    %c0_11 = arith.constant 0 : index
    %9 = vector.load %arg5[%c0_10, %c0_11] : memref<11x33xf32, #tpu.memory_space<vmem>>, vector<11x33xf32>
    %cst = arith.constant dense<0.000000e+00> : vector<48x33xf32>
    %10 = tpu.matmul %1, %9, %cst {dimension_numbers = #tpu.dot_dimension_numbers<[1], [0], [0], [1], [0, 0, 1, 1], [], []>} : vector<48x11xf32>, vector<11x33xf32>, vector<48x33xf32> -> vector<48x33xf32>
    %cst_12 = arith.constant 0.000000e+00 : f32
    %11 = vector.broadcast %cst_12 : f32 to vector<48x33xf32>
    %12 = arith.maximumf %10, %11 : vector<48x33xf32>
    %c0_13 = arith.constant 0 : index
    %c0_14 = arith.constant 0 : index
    %13 = vector.load %arg6[%c0_13, %c0_14] : memref<33x96xf32, #tpu.memory_space<vmem>>, vector<33x96xf32>
    %cst_15 = arith.constant dense<0.000000e+00> : vector<48x96xf32>
    %14 = tpu.matmul %12, %13, %cst_15 {dimension_numbers = #tpu.dot_dimension_numbers<[1], [0], [0], [1], [0, 0, 1, 1], [], []>} : vector<48x33xf32>, vector<33x96xf32>, vector<48x96xf32> -> vector<48x96xf32>
    %15 = vector.extract_strided_slice %14 {offsets = [0, 0], sizes = [48, 32], strides = [1, 1]} : vector<48x96xf32> to vector<48x32xf32>
    %16 = vector.extract_strided_slice %14 {offsets = [0, 32], sizes = [48, 32], strides = [1, 1]} : vector<48x96xf32> to vector<48x32xf32>
    %17 = vector.extract_strided_slice %14 {offsets = [0, 64], sizes = [48, 32], strides = [1, 1]} : vector<48x96xf32> to vector<48x32xf32>
    %cst_16 = arith.constant 0.000000e+00 : f32
    %18 = vector.broadcast %cst_16 : f32 to vector<48x32xf32>
    %19 = arith.maximumf %17, %18 : vector<48x32xf32>
    %c0_17 = arith.constant 0 : index
    %c0_18 = arith.constant 0 : index
    %20 = vector.load %arg9[%c0_17, %c0_18] : memref<96x48xf32, #tpu.memory_space<vmem>>, vector<96x48xf32>
    %cst_19 = arith.constant dense<0.000000e+00> : vector<96x32xf32>
    %21 = tpu.matmul %20, %15, %cst_19 {dimension_numbers = #tpu.dot_dimension_numbers<[1], [0], [0], [1], [0, 0, 1, 1], [], []>} : vector<96x48xf32>, vector<48x32xf32>, vector<96x32xf32> -> vector<96x32xf32>
    %c0_20 = arith.constant 0 : index
    %c0_21 = arith.constant 0 : index
    %22 = vector.load %arg10[%c0_20, %c0_21] : memref<96x32xf32, #tpu.memory_space<vmem>>, vector<96x32xf32>
    %23 = arith.mulf %21, %22 : vector<96x32xf32>
    %cst_22 = arith.constant dense<0.000000e+00> : vector<96x48xf32>
    %24 = tpu.matmul %23, %16, %cst_22 {dimension_numbers = #tpu.dot_dimension_numbers<[1], [1], [0], [0], [0, 0, 1, 0], [], []>} : vector<96x32xf32>, vector<48x32xf32>, vector<96x48xf32> -> vector<96x48xf32>
    %25 = vector.broadcast %6 : vector<96x1xf32> to vector<96x48xf32>
    %26 = vector.broadcast %4 : vector<1x48xf32> to vector<96x48xf32>
    %27 = arith.cmpf one, %25, %26 : vector<96x48xf32>
    %cst_23 = arith.constant 0.000000e+00 : f32
    %28 = vector.broadcast %cst_23 : f32 to vector<1x48xf32>
    %29 = arith.cmpf one, %5, %28 : vector<1x48xf32>
    %30 = vector.broadcast %29 : vector<1x48xi1> to vector<96x48xi1>
    %31 = arith.ori %27, %30 : vector<96x48xi1>
    %cst_24 = arith.constant 0xFF800000 : f32
    %32 = vector.broadcast %cst_24 : f32 to vector<96x48xf32>
    %33 = arith.select %31, %32, %24 : vector<96x48xi1>, vector<96x48xf32>
    %cst_25 = arith.constant dense<0xFF800000> : vector<96xf32>
    %34 = vector.multi_reduction <maximumf>, %33, %cst_25 [1] : vector<96x48xf32> to vector<96xf32>
    %35 = vector.shape_cast %34 : vector<96xf32> to vector<96x1xf32>
    %cst_26 = arith.constant 0xFF800000 : f32
    %36 = vector.broadcast %cst_26 : f32 to vector<96x1xf32>
    %37 = arith.cmpf oeq, %35, %36 : vector<96x1xf32>
    %cst_27 = arith.constant 0.000000e+00 : f32
    %38 = vector.broadcast %cst_27 : f32 to vector<96x1xf32>
    %39 = arith.select %37, %38, %35 : vector<96x1xi1>, vector<96x1xf32>
    %40 = vector.broadcast %39 : vector<96x1xf32> to vector<96x48xf32>
    %41 = arith.subf %33, %40 : vector<96x48xf32>
    %42 = math.exp %41 : vector<96x48xf32>
    %cst_28 = arith.constant dense<0.000000e+00> : vector<96xf32>
    %43 = vector.multi_reduction <add>, %42, %cst_28 [1] : vector<96x48xf32> to vector<96xf32>
    %44 = vector.shape_cast %43 : vector<96xf32> to vector<96x1xf32>
    %cst_29 = arith.constant 0.000000e+00 : f32
    %45 = vector.broadcast %cst_29 : f32 to vector<96x1xf32>
    %46 = arith.cmpf ogt, %44, %45 : vector<96x1xf32>
    %cst_30 = arith.constant 1.000000e+00 : f32
    %47 = vector.broadcast %cst_30 : f32 to vector<96x1xf32>
    %48 = arith.select %46, %44, %47 : vector<96x1xi1>, vector<96x1xf32>
    %49 = tpu.reciprocal %48 : vector<96x1xf32> -> vector<96x1xf32>
    %50 = vector.broadcast %49 : vector<96x1xf32> to vector<96x48xf32>
    %51 = arith.mulf %42, %50 : vector<96x48xf32>
    %cst_31 = arith.constant dense<0.000000e+00> : vector<96x32xf32>
    %52 = tpu.matmul %51, %19, %cst_31 {dimension_numbers = #tpu.dot_dimension_numbers<[1], [0], [0], [1], [0, 0, 1, 1], [], []>} : vector<96x48xf32>, vector<48x32xf32>, vector<96x32xf32> -> vector<96x32xf32>
    %c0_32 = arith.constant 0 : index
    %c0_33 = arith.constant 0 : index
    %53 = vector.load %arg10[%c0_32, %c0_33] : memref<96x32xf32, #tpu.memory_space<vmem>>, vector<96x32xf32>
    %54 = arith.mulf %52, %53 : vector<96x32xf32>
    %c0_34 = arith.constant 0 : index
    %c0_35 = arith.constant 0 : index
    %55 = vector.load %arg11[%c0_34, %c0_35] : memref<24x96xf32, #tpu.memory_space<vmem>>, vector<24x96xf32>
    %cst_36 = arith.constant dense<0.000000e+00> : vector<24x32xf32>
    %56 = tpu.matmul %55, %54, %cst_36 {dimension_numbers = #tpu.dot_dimension_numbers<[1], [0], [0], [1], [0, 0, 1, 1], [], []>} : vector<24x96xf32>, vector<96x32xf32>, vector<24x32xf32> -> vector<24x32xf32>
    %c0_37 = arith.constant 0 : index
    %c0_38 = arith.constant 0 : index
    %57 = vector.load %arg7[%c0_37, %c0_38] : memref<32x128xf32, #tpu.memory_space<vmem>>, vector<32x128xf32>
    %cst_39 = arith.constant dense<0.000000e+00> : vector<24x128xf32>
    %58 = tpu.matmul %56, %57, %cst_39 {dimension_numbers = #tpu.dot_dimension_numbers<[1], [0], [0], [1], [0, 0, 1, 1], [], []>} : vector<24x32xf32>, vector<32x128xf32>, vector<24x128xf32> -> vector<24x128xf32>
    %c0_40 = arith.constant 0 : index
    %c0_41 = arith.constant 0 : index
    %59 = vector.load %arg8[%c0_40, %c0_41] : memref<1x128xf32, #tpu.memory_space<vmem>>, vector<1x128xf32>
    %60 = vector.broadcast %59 : vector<1x128xf32> to vector<24x128xf32>
    %61 = arith.addf %58, %60 : vector<24x128xf32>
    %cst_42 = arith.constant 0.000000e+00 : f32
    %62 = vector.broadcast %cst_42 : f32 to vector<24x1xf32>
    %63 = arith.cmpf one, %8, %62 : vector<24x1xf32>
    %cst_43 = arith.constant 0.000000e+00 : f32
    %64 = vector.shape_cast %63 : vector<24x1xi1> to vector<24x1xi1>
    %65 = vector.broadcast %64 : vector<24x1xi1> to vector<24x128xi1>
    %66 = vector.broadcast %cst_43 : f32 to vector<24x128xf32>
    %67 = arith.select %65, %66, %61 : vector<24x128xi1>, vector<24x128xf32>
    %c0_44 = arith.constant 0 : index
    %c0_45 = arith.constant 0 : index
    %c0_46 = arith.constant 0 : index
    %68 = vector.load %arg12[%c0_44, %c0_45, %c0_46] : memref<1x24x128xf32, #tpu.memory_space<vmem>>, vector<1x24x128xf32>
    %69 = vector.shape_cast %68 : vector<1x24x128xf32> to vector<24x128xf32>
    %70 = vector.shape_cast %67 : vector<24x128xf32> to vector<1x24x128xf32>
    tpu.vector_store %arg12[%c0_44, %c0_45, %c0_46], %70 {strides = array<i32>} : memref<1x24x128xf32, #tpu.memory_space<vmem>>, vector<1x24x128xf32>,
    return
  }
  func.func @transform_0(%arg0: i32) -> (i32, i32, i32) {
    %c0_i32 = arith.constant 0 : i32
    %c0_i32_0 = arith.constant 0 : i32
    %c0_i32_1 = arith.constant 0 : i32
    return %arg0, %c0_i32, %c0_i32_0 : i32, i32, i32
  }
  func.func @transform_1(%arg0: i32) -> (i32, i32, i32) {
    %c0_i32 = arith.constant 0 : i32
    %c0_i32_0 = arith.constant 0 : i32
    %c0_i32_1 = arith.constant 0 : i32
    return %arg0, %c0_i32, %c0_i32_0 : i32, i32, i32
  }
  func.func @transform_2(%arg0: i32) -> (i32, i32, i32) {
    %c0_i32 = arith.constant 0 : i32
    %c0_i32_0 = arith.constant 0 : i32
    %c0_i32_1 = arith.constant 0 : i32
    return %arg0, %c0_i32, %c0_i32_0 : i32, i32, i32
  }
  func.func @transform_3(%arg0: i32) -> (i32, i32) {
    %c0_i32 = arith.constant 0 : i32
    %c0_i32_0 = arith.constant 0 : i32
    %c0_i32_1 = arith.constant 0 : i32
    return %c0_i32, %c0_i32_0 : i32, i32
  }
  func.func @transform_4(%arg0: i32) -> (i32, i32) {
    %c0_i32 = arith.constant 0 : i32
    %c0_i32_0 = arith.constant 0 : i32
    %c0_i32_1 = arith.constant 0 : i32
    return %c0_i32, %c0_i32_0 : i32, i32
  }
  func.func @transform_5(%arg0: i32) -> (i32, i32) {
    %c0_i32 = arith.constant 0 : i32
    %c0_i32_0 = arith.constant 0 : i32
    %c0_i32_1 = arith.constant 0 : i32
    return %c0_i32, %c0_i32_0 : i32, i32
  }
  func.func @transform_6(%arg0: i32) -> (i32, i32) {
    %c0_i32 = arith.constant 0 : i32
    %c0_i32_0 = arith.constant 0 : i32
    %c0_i32_1 = arith.constant 0 : i32
    return %c0_i32, %c0_i32_0 : i32, i32
  }
  func.func @transform_7(%arg0: i32) -> (i32, i32) {
    %c0_i32 = arith.constant 0 : i32
    %c0_i32_0 = arith.constant 0 : i32
    %c0_i32_1 = arith.constant 0 : i32
    return %c0_i32, %c0_i32_0 : i32, i32
  }
  func.func @transform_8(%arg0: i32) -> (i32, i32) {
    %c0_i32 = arith.constant 0 : i32
    %c0_i32_0 = arith.constant 0 : i32
    %c0_i32_1 = arith.constant 0 : i32
    return %c0_i32, %c0_i32_0 : i32, i32
  }
  func.func @transform_9(%arg0: i32) -> (i32, i32) {
    %c0_i32 = arith.constant 0 : i32
    %c0_i32_0 = arith.constant 0 : i32
    %c0_i32_1 = arith.constant 0 : i32
    return %c0_i32, %c0_i32_0 : i32, i32
  }
  func.func @transform_10(%arg0: i32) -> (i32, i32) {
    %c0_i32 = arith.constant 0 : i32
    %c0_i32_0 = arith.constant 0 : i32
    %c0_i32_1 = arith.constant 0 : i32
    return %c0_i32, %c0_i32_0 : i32, i32
  }
  func.func @transform_11(%arg0: i32) -> (i32, i32, i32) {
    %c0_i32 = arith.constant 0 : i32
    %c0_i32_0 = arith.constant 0 : i32
    %c0_i32_1 = arith.constant 0 : i32
    return %arg0, %c0_i32, %c0_i32_0 : i32, i32, i32
  }
}

</mosaic_0001>

<llo_original>
// kernel: tpu_custom_call.1
$region0: #{tpu_custom_call.1}
  #allocation0 [shape = 'u32[]', space=smem, size = 0x4, offset = 0x4, fixed_abs, tag = 'smem constant byte address 0x4 - core index']
  #allocation1 [shape = 'u32[144,128]{1,0:T(1,128)}', space=vmem, size = 0x12000, scoped, tag = 'internal scratch']
  %s0 = inlined_call_operand.vmem [shape: f32[1,48,11], index: 0, kind: input, shape index: {}]
  %s1 = inlined_call_operand.vmem [shape: f32[1,2,48], index: 1, kind: input, shape index: {}]
  %s2 = inlined_call_operand.vmem [shape: f32[1,24,1], index: 2, kind: input, shape index: {}]
  %s3 = inlined_call_operand.vmem [shape: f32[96,1], index: 3, kind: input, shape index: {}]
  %s4 = inlined_call_operand.vmem [shape: f32[11,33], index: 4, kind: input, shape index: {}]
  %s5 = inlined_call_operand.vmem [shape: f32[33,96], index: 5, kind: input, shape index: {}]
  %s6 = inlined_call_operand.vmem [shape: f32[32,128], index: 6, kind: input, shape index: {}]
  %s7 = inlined_call_operand.vmem [shape: f32[1,128], index: 7, kind: input, shape index: {}]
  %s8 = inlined_call_operand.vmem [shape: f32[96,48], index: 8, kind: input, shape index: {}]
  %s9 = inlined_call_operand.vmem [shape: f32[96,32], index: 9, kind: input, shape index: {}]
  %s10 = inlined_call_operand.vmem [shape: f32[24,96], index: 10, kind: input, shape index: {}]
  %s11 = inlined_call_operand.hbm [shape: f32[1,24,128], index: 11, kind: output, shape index: {}]
  %s12 = sld [smem:[#allocation0]]
  $region54: #{tpu_custom_call.1} parent=0
    _
  %s14 = ssub.s32 1, %s12
  %s15 = scalar_select 0, %s14, %s12
  $region1: #{tpu_custom_call.1} parent=0
    #allocation2 [shape = 'u8[12288]{0}', space=vmem, size = 0x3000, scoped, tag = 'output window, operand 0, single buffered']
    #allocation3 [shape = 's32[1]{0}', space=sflag, size = 0x4, scoped, tag = 'scoped memory for tpu_custom_call.1']
    %16 = vsyncpa [#allocation3], 0
    // Predicated region
    $region2: #{tpu_custom_call.1} parent=1 // pred_check
      _
    $region3: #{tpu_custom_call.1} parent=1 // pred_check_branch
      %18 = sbr.rel (0) target = $region5
    $region4: #{tpu_custom_call.1} parent=1 // pred_region
      _
    $region5: #{tpu_custom_call.1} parent=1 // pred_fallthru
      _
    // Predicated region
    $region6: #{tpu_custom_call.1} parent=1 // pred_check
      _
    $region7: #{tpu_custom_call.1} parent=1 // pred_check_branch
      %20 = sbr.rel (0) target = $region9
    $region8: #{tpu_custom_call.1} parent=1 // pred_region
      _
    $region9: #{tpu_custom_call.1} parent=1 // pred_fallthru
      _
    // Predicated region
    $region10: #{tpu_custom_call.1} parent=1 // pred_check
      _
    $region11: #{tpu_custom_call.1} parent=1 // pred_check_branch
      %22 = sbr.rel (0) target = $region13
    $region12: #{tpu_custom_call.1} parent=1 // pred_region
      _
    $region13: #{tpu_custom_call.1} parent=1 // pred_fallthru
      _
    // Predicated region
    $region14: #{tpu_custom_call.1} parent=1 // pred_check
      _
    $region15: #{tpu_custom_call.1} parent=1 // pred_check_branch
      %24 = sbr.rel (0) target = $region17
    $region16: #{tpu_custom_call.1} parent=1 // pred_region
      _
    $region17: #{tpu_custom_call.1} parent=1 // pred_fallthru
      _
    // Predicated region
    $region18: #{tpu_custom_call.1} parent=1 // pred_check
      _
    $region19: #{tpu_custom_call.1} parent=1 // pred_check_branch
      %26 = sbr.rel (0) target = $region21
    $region20: #{tpu_custom_call.1} parent=1 // pred_region
      _
    $region21: #{tpu_custom_call.1} parent=1 // pred_fallthru
      _
    // Predicated region
    $region22: #{tpu_custom_call.1} parent=1 // pred_check
      _
    $region23: #{tpu_custom_call.1} parent=1 // pred_check_branch
      %28 = sbr.rel (0) target = $region25
    $region24: #{tpu_custom_call.1} parent=1 // pred_region
      _
    $region25: #{tpu_custom_call.1} parent=1 // pred_fallthru
      _
    // Predicated region
    $region26: #{tpu_custom_call.1} parent=1 // pred_check
      _
    $region27: #{tpu_custom_call.1} parent=1 // pred_check_branch
      %30 = sbr.rel (0) target = $region29
    $region28: #{tpu_custom_call.1} parent=1 // pred_region
      _
    $region29: #{tpu_custom_call.1} parent=1 // pred_fallthru
      _
    // Predicated region
    $region30: #{tpu_custom_call.1} parent=1 // pred_check
      _
    $region31: #{tpu_custom_call.1} parent=1 // pred_check_branch
      %32 = sbr.rel (0) target = $region33
    $region32: #{tpu_custom_call.1} parent=1 // pred_region
      _
    $region33: #{tpu_custom_call.1} parent=1 // pred_fallthru
      _
    // Predicated region
    $region34: #{tpu_custom_call.1} parent=1 // pred_check
      _
    $region35: #{tpu_custom_call.1} parent=1 // pred_check_branch
      %34 = sbr.rel (0) target = $region37
    $region36: #{tpu_custom_call.1} parent=1 // pred_region
      _
    $region37: #{tpu_custom_call.1} parent=1 // pred_fallthru
      _
    // Predicated region
    $region38: #{tpu_custom_call.1} parent=1 // pred_check
      _
    $region39: #{tpu_custom_call.1} parent=1 // pred_check_branch
      %36 = sbr.rel (0) target = $region41
    $region40: #{tpu_custom_call.1} parent=1 // pred_region
      _
    $region41: #{tpu_custom_call.1} parent=1 // pred_fallthru
      _
    // Predicated region
    $region42: #{tpu_custom_call.1} parent=1 // pred_check
      _
    $region43: #{tpu_custom_call.1} parent=1 // pred_check_branch
      %38 = sbr.rel (0) target = $region45
    $region44: #{tpu_custom_call.1} parent=1 // pred_region
      _
    $region45: #{tpu_custom_call.1} parent=1 // pred_fallthru
      _
    %v39 = vld [vmem:[%s0] sm:$0xff]
    %v40 = vld [vmem:[%s0 + $0x8] sm:$0xff]
    %v41 = vld [vmem:[%s0 + $0x10] sm:$0xff]
    %v42 = vld [vmem:[%s0 + $0x18] sm:$0xff]
    %v43 = vld [vmem:[%s0 + $0x20] sm:$0xff]
    %v44 = vld [vmem:[%s0 + $0x28] sm:$0xff]
    %v45 = vld [vmem:[%s1] sm:$0x3]
    %v46 = vld [vmem:[%s3] sm:$0xff]
    %v47 = vld [vmem:[%s3 + $0x8] sm:$0xff]
    %v48 = vld [vmem:[%s3 + $0x10] sm:$0xff]
    %v49 = vld [vmem:[%s3 + $0x18] sm:$0xff]
    %v50 = vld [vmem:[%s3 + $0x20] sm:$0xff]
    %v51 = vld [vmem:[%s3 + $0x28] sm:$0xff]
    %v52 = vld [vmem:[%s3 + $0x30] sm:$0xff]
    %v53 = vld [vmem:[%s3 + $0x38] sm:$0xff]
    %v54 = vld [vmem:[%s3 + $0x40] sm:$0xff]
    %v55 = vld [vmem:[%s3 + $0x48] sm:$0xff]
    %v56 = vld [vmem:[%s3 + $0x50] sm:$0xff]
    %v57 = vld [vmem:[%s3 + $0x58] sm:$0xff]
    %v58 = vld [vmem:[%s2] sm:$0xff]
    %v59 = vld [vmem:[%s2 + $0x8] sm:$0xff]
    %v60 = vld [vmem:[%s2 + $0x10] sm:$0xff]
    %v61 = vld [vmem:[%s4] sm:$0xff]
    %v62 = vld [vmem:[%s4 + $0x8] sm:$0x7]
    %vm63 = vcmask 89088
    %v65 = vsel %vm63, %v39, 0
    %v68 = vsel %vm63, %v40, 0
    %v71 = vsel %vm63, %v41, 0
    %v74 = vsel %vm63, %v42, 0
    %v77 = vsel %vm63, %v43, 0
    %v80 = vsel %vm63, %v44, 0
    %vm82 = vcmask 1042432
    %v84 = vsel %vm82, %v62, 0
    %86 = vmatprep.subr.mxu0 0.0
    %87 = vmatpush1.msra.mxu0 %v61
    %88 = vmatprep.subr.mxu0 0.0
    %89 = vmatpush1.msra.mxu0 %v84
    %90 = vmatprep.subr.mxu0 0.0
    %91 = vmatpush1.msra.mxu0 0.0
    %92 = vmatprep.subr.mxu0 0.0
    %93 = vmatpush1.msra.mxu0 0.0
    %94 = vmatprep.subr.mxu0 0.0
    %95 = vmatpush1.msra.mxu0 0.0
    %96 = vmatprep.subr.mxu0 0.0
    %97 = vmatpush1.msra.mxu0 0.0
    %98 = vmatprep.subr.mxu0 0.0
    %99 = vmatpush1.msra.mxu0 0.0
    %100 = vmatprep.subr.mxu0 0.0
    %101 = vmatpush1.msra.mxu0 0.0
    %102 = vmatprep.subr.mxu0 0.0
    %103 = vmatpush1.msra.mxu0 0.0
    %104 = vmatprep.subr.mxu0 0.0
    %105 = vmatpush1.msra.mxu0 0.0
    %106 = vmatprep.subr.mxu0 0.0
    %107 = vmatpush1.msra.mxu0 0.0
    %108 = vmatprep.subr.mxu0 0.0
    %109 = vmatpush1.msra.mxu0 0.0
    %110 = vmatprep.subr.mxu0 0.0
    %111 = vmatpush1.msra.mxu0 0.0
    %112 = vmatprep.subr.mxu0 0.0
    %113 = vmatpush1.msra.mxu0 0.0
    %114 = vmatprep.subr.mxu0 0.0
    %115 = vmatpush1.msra.mxu0 0.0
    %116 = vmatprep.subr.mxu0 0.0
    %117 = vmatpush1.msra.mxu0 0.0
    %118 = vmatprep.subr.mxu0 0.0
    %119 = vmatpush1.msra.mxu0 0.0
    %120 = vmatprep.subr.mxu0 0.0
    %121 = vmatpush1.msra.mxu0 0.0
    %122 = vmatprep.subr.mxu0 0.0
    %123 = vmatpush1.msra.mxu0 0.0
    %124 = vmatprep.subr.mxu0 0.0
    %125 = vmatpush1.msra.mxu0 0.0
    %126 = vmatprep.subr.mxu0 0.0
    %127 = vmatpush1.msra.mxu0 0.0
    %128 = vmatprep.subr.mxu0 0.0
    %129 = vmatpush1.msra.mxu0 0.0
    %130 = vmatprep.subr.mxu0 0.0
    %131 = vmatpush1.msra.mxu0 0.0
    %132 = vmatprep.subr.mxu0 0.0
    %133 = vmatpush1.msra.mxu0 0.0
    %134 = vmatprep.subr.mxu0 0.0
    %135 = vmatpush1.msra.mxu0 0.0
    %136 = vmatprep.subr.mxu0 0.0
    %137 = vmatpush1.msra.mxu0 0.0
    %138 = vmatprep.subr.mxu0 0.0
    %139 = vmatpush1.msra.mxu0 0.0
    %140 = vmatprep.subr.mxu0 0.0
    %141 = vmatpush1.msra.mxu0 0.0
    %142 = vmatprep.subr.mxu0 0.0
    %143 = vmatpush1.msra.mxu0 0.0
    %144 = vmatprep.subr.mxu0 0.0
    %145 = vmatpush1.msra.mxu0 0.0
    %146 = vmatprep.subr.mxu0 0.0
    %147 = vmatpush1.msra.mxu0 0.0
    %148 = vmatprep.subr.mxu0 0.0
    %149 = vmatpush1.msra.mxu0 0.0
    %150 = vmatprep.mubr.f32.mxu0 0.0
    %151 = vmatmul.mubr.f32.gmra.mrb[0].mxu0 %v65
    %v152 = vpop.f32.mrb[0].mxu0
    %v153 = vadd.f32 0.0, %v152
    %v154 = vpop.f32.mrb[0].mxu0
    %155 = vmatprep.mubr.f32.mxu0 0.0
    %156 = vmatmul.mubr.f32.gmra.mrb[0].mxu0 %v68
    %v157 = vpop.f32.mrb[0].mxu0
    %v158 = vadd.f32 0.0, %v157
    %v159 = vpop.f32.mrb[0].mxu0
    %160 = vmatprep.mubr.f32.mxu0 0.0
    %161 = vmatmul.mubr.f32.gmra.mrb[0].mxu0 %v71
    %v162 = vpop.f32.mrb[0].mxu0
    %v163 = vadd.f32 0.0, %v162
    %v164 = vpop.f32.mrb[0].mxu0
    %165 = vmatprep.mubr.f32.mxu0 0.0
    %166 = vmatmul.mubr.f32.gmra.mrb[0].mxu0 %v74
    %v167 = vpop.f32.mrb[0].mxu0
    %v168 = vadd.f32 0.0, %v167
    %v169 = vpop.f32.mrb[0].mxu0
    %170 = vmatprep.mubr.f32.mxu0 0.0
    %171 = vmatmul.mubr.f32.gmra.mrb[0].mxu0 %v77
    %v172 = vpop.f32.mrb[0].mxu0
    %v173 = vadd.f32 0.0, %v172
    %v174 = vpop.f32.mrb[0].mxu0
    %175 = vmatprep.mubr.f32.mxu0 0.0
    %176 = vmatmul.mubr.f32.gmra.mrb[0].mxu0 %v80
    %v177 = vpop.f32.mrb[0].mxu0
    %v178 = vadd.f32 0.0, %v177
    %v179 = vpop.f32.mrb[0].mxu0
    %180 = vdwg.mxu0
    %v181 = vmax.f32 %v153, 0.0
    %v182 = vmax.f32 %v158, 0.0
    %v183 = vmax.f32 %v163, 0.0
    %v184 = vmax.f32 %v168, 0.0
    %v185 = vmax.f32 %v173, 0.0
    %v186 = vmax.f32 %v178, 0.0
    %v187 = vld [vmem:[%s5] sm:$0xff]
    %v188 = vld [vmem:[%s5 + $0x8] sm:$0xff]
    %v189 = vld [vmem:[%s5 + $0x10] sm:$0xff]
    %v190 = vld [vmem:[%s5 + $0x18] sm:$0xff]
    %v191 = vld [vmem:[%s5 + $0x20] sm:$0x1]
    %vm192 = vcmask 269312
    %v194 = vsel %vm192, %v181, 0
    %v197 = vsel %vm192, %v182, 0
    %v200 = vsel %vm192, %v183, 0
    %v203 = vsel %vm192, %v184, 0
    %v206 = vsel %vm192, %v185, 0
    %v209 = vsel %vm192, %v186, 0
    %vm211 = vcmask 1040384
    %v213 = vsel %vm211, %v191, 0
    %215 = vmatprep.subr.mxu0 0.0
    %216 = vmatpush1.msra.mxu0 %v187
    %217 = vmatprep.subr.mxu0 0.0
    %218 = vmatpush1.msra.mxu0 %v188
    %219 = vmatprep.subr.mxu0 0.0
    %220 = vmatpush1.msra.mxu0 %v189
    %221 = vmatprep.subr.mxu0 0.0
    %222 = vmatpush1.msra.mxu0 %v190
    %223 = vmatprep.subr.mxu0 0.0
    %224 = vmatpush1.msra.mxu0 %v213
    %225 = vmatprep.subr.mxu0 0.0
    %226 = vmatpush1.msra.mxu0 0.0
    %227 = vmatprep.subr.mxu0 0.0
    %228 = vmatpush1.msra.mxu0 0.0
    %229 = vmatprep.subr.mxu0 0.0
    %230 = vmatpush1.msra.mxu0 0.0
    %231 = vmatprep.subr.mxu0 0.0
    %232 = vmatpush1.msra.mxu0 0.0
    %233 = vmatprep.subr.mxu0 0.0
    %234 = vmatpush1.msra.mxu0 0.0
    %235 = vmatprep.subr.mxu0 0.0
    %236 = vmatpush1.msra.mxu0 0.0
    %237 = vmatprep.subr.mxu0 0.0
    %238 = vmatpush1.msra.mxu0 0.0
    %239 = vmatprep.subr.mxu0 0.0
    %240 = vmatpush1.msra.mxu0 0.0
    %241 = vmatprep.subr.mxu0 0.0
    %242 = vmatpush1.msra.mxu0 0.0
    %243 = vmatprep.subr.mxu0 0.0
    %244 = vmatpush1.msra.mxu0 0.0
    %245 = vmatprep.subr.mxu0 0.0
    %246 = vmatpush1.msra.mxu0 0.0
    %247 = vmatprep.subr.mxu0 0.0
    %248 = vmatpush1.msra.mxu0 0.0
    %249 = vmatprep.subr.mxu0 0.0
    %250 = vmatpush1.msra.mxu0 0.0
    %251 = vmatprep.subr.mxu0 0.0
    %252 = vmatpush1.msra.mxu0 0.0
    %253 = vmatprep.subr.mxu0 0.0
    %254 = vmatpush1.msra.mxu0 0.0
    %255 = vmatprep.subr.mxu0 0.0
    %256 = vmatpush1.msra.mxu0 0.0
    %257 = vmatprep.subr.mxu0 0.0
    %258 = vmatpush1.msra.mxu0 0.0
    %259 = vmatprep.subr.mxu0 0.0
    %260 = vmatpush1.msra.mxu0 0.0
    %261 = vmatprep.subr.mxu0 0.0
    %262 = vmatpush1.msra.mxu0 0.0
    %263 = vmatprep.subr.mxu0 0.0
    %264 = vmatpush1.msra.mxu0 0.0
    %265 = vmatprep.subr.mxu0 0.0
    %266 = vmatpush1.msra.mxu0 0.0
    %267 = vmatprep.subr.mxu0 0.0
    %268 = vmatpush1.msra.mxu0 0.0
    %269 = vmatprep.subr.mxu0 0.0
    %270 = vmatpush1.msra.mxu0 0.0
    %271 = vmatprep.subr.mxu0 0.0
    %272 = vmatpush1.msra.mxu0 0.0
    %273 = vmatprep.subr.mxu0 0.0
    %274 = vmatpush1.msra.mxu0 0.0
    %275 = vmatprep.subr.mxu0 0.0
    %276 = vmatpush1.msra.mxu0 0.0
    %277 = vmatprep.subr.mxu0 0.0
    %278 = vmatpush1.msra.mxu0 0.0
    %279 = vmatprep.mubr.f32.mxu0 0.0
    %280 = vmatmul.mubr.f32.gmra.mrb[0].mxu0 %v194
    %v281 = vpop.f32.mrb[0].mxu0
    %v282 = vadd.f32 0.0, %v281
    %v283 = vpop.f32.mrb[0].mxu0
    %284 = vmatprep.mubr.f32.mxu0 0.0
    %285 = vmatmul.mubr.f32.gmra.mrb[0].mxu0 %v197
    %v286 = vpop.f32.mrb[0].mxu0
    %v287 = vadd.f32 0.0, %v286
    %v288 = vpop.f32.mrb[0].mxu0
    %289 = vmatprep.mubr.f32.mxu0 0.0
    %290 = vmatmul.mubr.f32.gmra.mrb[0].mxu0 %v200
    %v291 = vpop.f32.mrb[0].mxu0
    %v292 = vadd.f32 0.0, %v291
    %v293 = vpop.f32.mrb[0].mxu0
    %294 = vmatprep.mubr.f32.mxu0 0.0
    %295 = vmatmul.mubr.f32.gmra.mrb[0].mxu0 %v203
    %v296 = vpop.f32.mrb[0].mxu0
    %v297 = vadd.f32 0.0, %v296
    %v298 = vpop.f32.mrb[0].mxu0
    %299 = vmatprep.mubr.f32.mxu0 0.0
    %300 = vmatmul.mubr.f32.gmra.mrb[0].mxu0 %v206
    %v301 = vpop.f32.mrb[0].mxu0
    %v302 = vadd.f32 0.0, %v301
    %v303 = vpop.f32.mrb[0].mxu0
    %304 = vmatprep.mubr.f32.mxu0 0.0
    %305 = vmatmul.mubr.f32.gmra.mrb[0].mxu0 %v209
    %v306 = vpop.f32.mrb[0].mxu0
    %v307 = vadd.f32 0.0, %v306
    %v308 = vpop.f32.mrb[0].mxu0
    %309 = vdwg.mxu0
    %v310 = vmax.f32 %v282, 0.0
    %v311 = vmax.f32 %v287, 0.0
    %v312 = vmax.f32 %v292, 0.0
    %v313 = vmax.f32 %v297, 0.0
    %v314 = vmax.f32 %v302, 0.0
    %v315 = vmax.f32 %v307, 0.0
    %v316 = vld [vmem:[%s8] sm:$0xff]
    %v317 = vld [vmem:[%s8 + $0x8] sm:$0xff]
    %v318 = vld [vmem:[%s8 + $0x10] sm:$0xff]
    %v319 = vld [vmem:[%s8 + $0x18] sm:$0xff]
    %v320 = vld [vmem:[%s8 + $0x20] sm:$0xff]
    %v321 = vld [vmem:[%s8 + $0x28] sm:$0xff]
    %v322 = vld [vmem:[%s8 + $0x30] sm:$0xff]
    %v323 = vld [vmem:[%s8 + $0x38] sm:$0xff]
    %v324 = vld [vmem:[%s8 + $0x40] sm:$0xff]
    %v325 = vld [vmem:[%s8 + $0x48] sm:$0xff]
    %v326 = vld [vmem:[%s8 + $0x50] sm:$0xff]
    %v327 = vld [vmem:[%s8 + $0x58] sm:$0xff]
    %vm328 = vcmask 392192
    %v330 = vsel %vm328, %v316, 0
    %v333 = vsel %vm328, %v317, 0
    %v336 = vsel %vm328, %v318, 0
    %v339 = vsel %vm328, %v319, 0
    %v342 = vsel %vm328, %v320, 0
    %v345 = vsel %vm328, %v321, 0
    %v348 = vsel %vm328, %v322, 0
    %v351 = vsel %vm328, %v323, 0
    %v354 = vsel %vm328, %v324, 0
    %v357 = vsel %vm328, %v325, 0
    %v360 = vsel %vm328, %v326, 0
    %v363 = vsel %vm328, %v327, 0
    %365 = vmatprep.subr.mxu0 0.0
    %366 = vmatpush1.msra.mxu0 %v282
    %367 = vmatprep.subr.mxu0 0.0
    %368 = vmatpush1.msra.mxu0 %v287
    %369 = vmatprep.subr.mxu0 0.0
    %370 = vmatpush1.msra.mxu0 %v292
    %371 = vmatprep.subr.mxu0 0.0
    %372 = vmatpush1.msra.mxu0 %v297
    %373 = vmatprep.subr.mxu0 0.0
    %374 = vmatpush1.msra.mxu0 %v302
    %375 = vmatprep.subr.mxu0 0.0
    %376 = vmatpush1.msra.mxu0 %v307
    %377 = vmatprep.subr.mxu0 0.0
    %378 = vmatpush1.msra.mxu0 0.0
    %379 = vmatprep.subr.mxu0 0.0
    %380 = vmatpush1.msra.mxu0 0.0
    %381 = vmatprep.subr.mxu0 0.0
    %382 = vmatpush1.msra.mxu0 0.0
    %383 = vmatprep.subr.mxu0 0.0
    %384 = vmatpush1.msra.mxu0 0.0
    %385 = vmatprep.subr.mxu0 0.0
    %386 = vmatpush1.msra.mxu0 0.0
    %387 = vmatprep.subr.mxu0 0.0
    %388 = vmatpush1.msra.mxu0 0.0
    %389 = vmatprep.subr.mxu0 0.0
    %390 = vmatpush1.msra.mxu0 0.0
    %391 = vmatprep.subr.mxu0 0.0
    %392 = vmatpush1.msra.mxu0 0.0
    %393 = vmatprep.subr.mxu0 0.0
    %394 = vmatpush1.msra.mxu0 0.0
    %395 = vmatprep.subr.mxu0 0.0
    %396 = vmatpush1.msra.mxu0 0.0
    %397 = vmatprep.subr.mxu0 0.0
    %398 = vmatpush1.msra.mxu0 0.0
    %399 = vmatprep.subr.mxu0 0.0
    %400 = vmatpush1.msra.mxu0 0.0
    %401 = vmatprep.subr.mxu0 0.0
    %402 = vmatpush1.msra.mxu0 0.0
    %403 = vmatprep.subr.mxu0 0.0
    %404 = vmatpush1.msra.mxu0 0.0
    %405 = vmatprep.subr.mxu0 0.0
    %406 = vmatpush1.msra.mxu0 0.0
    %407 = vmatprep.subr.mxu0 0.0
    %408 = vmatpush1.msra.mxu0 0.0
    %409 = vmatprep.subr.mxu0 0.0
    %410 = vmatpush1.msra.mxu0 0.0
    %411 = vmatprep.subr.mxu0 0.0
    %412 = vmatpush1.msra.mxu0 0.0
    %413 = vmatprep.subr.mxu0 0.0
    %414 = vmatpush1.msra.mxu0 0.0
    %415 = vmatprep.subr.mxu0 0.0
    %416 = vmatpush1.msra.mxu0 0.0
    %417 = vmatprep.subr.mxu0 0.0
    %418 = vmatpush1.msra.mxu0 0.0
    %419 = vmatprep.subr.mxu0 0.0
    %420 = vmatpush1.msra.mxu0 0.0
    %421 = vmatprep.subr.mxu0 0.0
    %422 = vmatpush1.msra.mxu0 0.0
    %423 = vmatprep.subr.mxu0 0.0
    %424 = vmatpush1.msra.mxu0 0.0
    %425 = vmatprep.subr.mxu0 0.0
    %426 = vmatpush1.msra.mxu0 0.0
    %427 = vmatprep.subr.mxu0 0.0
    %428 = vmatpush1.msra.mxu0 0.0
    %429 = vmatprep.mubr.f32.mxu0 0.0
    %430 = vmatmul.mubr.f32.gmra.mrb[0].mxu0 %v330
    %v431 = vpop.f32.mrb[0].mxu0
    %v432 = vadd.f32 0.0, %v431
    %v433 = vpop.f32.mrb[0].mxu0
    %434 = vmatprep.mubr.f32.mxu0 0.0
    %435 = vmatmul.mubr.f32.gmra.mrb[0].mxu0 %v333
    %v436 = vpop.f32.mrb[0].mxu0
    %v437 = vadd.f32 0.0, %v436
    %v438 = vpop.f32.mrb[0].mxu0
    %439 = vmatprep.mubr.f32.mxu0 0.0
    %440 = vmatmul.mubr.f32.gmra.mrb[0].mxu0 %v336
    %v441 = vpop.f32.mrb[0].mxu0
    %v442 = vadd.f32 0.0, %v441
    %v443 = vpop.f32.mrb[0].mxu0
    %444 = vmatprep.mubr.f32.mxu0 0.0
    %445 = vmatmul.mubr.f32.gmra.mrb[0].mxu0 %v339
    %v446 = vpop.f32.mrb[0].mxu0
    %v447 = vadd.f32 0.0, %v446
    %v448 = vpop.f32.mrb[0].mxu0
    %449 = vmatprep.mubr.f32.mxu0 0.0
    %450 = vmatmul.mubr.f32.gmra.mrb[0].mxu0 %v342
    %v451 = vpop.f32.mrb[0].mxu0
    %v452 = vadd.f32 0.0, %v451
    %v453 = vpop.f32.mrb[0].mxu0
    %454 = vmatprep.mubr.f32.mxu0 0.0
    %455 = vmatmul.mubr.f32.gmra.mrb[0].mxu0 %v345
    %v456 = vpop.f32.mrb[0].mxu0
    %v457 = vadd.f32 0.0, %v456
    %v458 = vpop.f32.mrb[0].mxu0
    %459 = vmatprep.mubr.f32.mxu0 0.0
    %460 = vmatmul.mubr.f32.gmra.mrb[0].mxu0 %v348
    %v461 = vpop.f32.mrb[0].mxu0
    %v462 = vadd.f32 0.0, %v461
    %v463 = vpop.f32.mrb[0].mxu0
    %464 = vmatprep.mubr.f32.mxu0 0.0
    %465 = vmatmul.mubr.f32.gmra.mrb[0].mxu0 %v351
    %v466 = vpop.f32.mrb[0].mxu0
    %v467 = vadd.f32 0.0, %v466
    %v468 = vpop.f32.mrb[0].mxu0
    %469 = vmatprep.mubr.f32.mxu0 0.0
    %470 = vmatmul.mubr.f32.gmra.mrb[0].mxu0 %v354
    %v471 = vpop.f32.mrb[0].mxu0
    %v472 = vadd.f32 0.0, %v471
    %v473 = vpop.f32.mrb[0].mxu0
    %474 = vmatprep.mubr.f32.mxu0 0.0
    %475 = vmatmul.mubr.f32.gmra.mrb[0].mxu0 %v357
    %v476 = vpop.f32.mrb[0].mxu0
    %v477 = vadd.f32 0.0, %v476
    %v478 = vpop.f32.mrb[0].mxu0
    %479 = vmatprep.mubr.f32.mxu0 0.0
    %480 = vmatmul.mubr.f32.gmra.mrb[0].mxu0 %v360
    %v481 = vpop.f32.mrb[0].mxu0
    %v482 = vadd.f32 0.0, %v481
    %v483 = vpop.f32.mrb[0].mxu0
    %484 = vmatprep.mubr.f32.mxu0 0.0
    %485 = vmatmul.mubr.f32.gmra.mrb[0].mxu0 %v363
    %v486 = vpop.f32.mrb[0].mxu0
    %v487 = vadd.f32 0.0, %v486
    %v488 = vpop.f32.mrb[0].mxu0
    %489 = vdwg.mxu0
    %v490 = vld [vmem:[%s9] sm:$0xff]
    %v491 = vld [vmem:[%s9 + $0x8] sm:$0xff]
    %v492 = vld [vmem:[%s9 + $0x10] sm:$0xff]
    %v493 = vld [vmem:[%s9 + $0x18] sm:$0xff]
    %v494 = vld [vmem:[%s9 + $0x20] sm:$0xff]
    %v495 = vld [vmem:[%s9 + $0x28] sm:$0xff]
    %v496 = vld [vmem:[%s9 + $0x30] sm:$0xff]
    %v497 = vld [vmem:[%s9 + $0x38] sm:$0xff]
    %v498 = vld [vmem:[%s9 + $0x40] sm:$0xff]
    %v499 = vld [vmem:[%s9 + $0x48] sm:$0xff]
    %v500 = vld [vmem:[%s9 + $0x50] sm:$0xff]
    %v501 = vld [vmem:[%s9 + $0x58] sm:$0xff]
    %v502 = vmul.f32 %v432, %v490
    %v503 = vmul.f32 %v437, %v491
    %v504 = vmul.f32 %v442, %v492
    %v505 = vmul.f32 %v447, %v493
    %v506 = vmul.f32 %v452, %v494
    %v507 = vmul.f32 %v457, %v495
    %v508 = vmul.f32 %v462, %v496
    %v509 = vmul.f32 %v467, %v497
    %v510 = vmul.f32 %v472, %v498
    %v511 = vmul.f32 %v477, %v499
    %v512 = vmul.f32 %v482, %v500
    %v513 = vmul.f32 %v487, %v501
    %520 = vrot.lane.b32.xlu0 %v282, 96
    %v521 = vpop.permute.xlu0 %520
    %522 = vrot.lane.b32.xlu0 %v287, 96
    %v523 = vpop.permute.xlu0 %522
    %524 = vrot.lane.b32.xlu0 %v292, 96
    %v525 = vpop.permute.xlu0 %524
    %526 = vrot.lane.b32.xlu0 %v297, 96
    %v527 = vpop.permute.xlu0 %526
    %528 = vrot.lane.b32.xlu0 %v302, 96
    %v529 = vpop.permute.xlu0 %528
    %530 = vrot.lane.b32.xlu0 %v307, 96
    %v531 = vpop.permute.xlu0 %530
    %vm532 = vcmask 261120
    %v534 = vsel %vm532, %v502, 0
    %v537 = vsel %vm532, %v503, 0
    %v540 = vsel %vm532, %v504, 0
    %v543 = vsel %vm532, %v505, 0
    %v546 = vsel %vm532, %v506, 0
    %v549 = vsel %vm532, %v507, 0
    %v552 = vsel %vm532, %v508, 0
    %v555 = vsel %vm532, %v509, 0
    %v558 = vsel %vm532, %v510, 0
    %v561 = vsel %vm532, %v511, 0
    %v564 = vsel %vm532, %v512, 0
    %v567 = vsel %vm532, %v513, 0
    %v569 = vsel %vm532, %v521, 0
    %v571 = vsel %vm532, %v523, 0
    %v573 = vsel %vm532, %v525, 0
    %v575 = vsel %vm532, %v527, 0
    %v577 = vsel %vm532, %v529, 0
    %v579 = vsel %vm532, %v531, 0
    %581 = vmatprep.subr.mxu0 0.0
    %582 = vmatpush1.xpose.msra.mxu0 %v569
    %583 = vmatprep.subr.mxu0 0.0
    %584 = vmatpush1.xpose.msra.mxu0 %v571
    %585 = vmatprep.subr.mxu0 0.0
    %586 = vmatpush1.xpose.msra.mxu0 %v573
    %587 = vmatprep.subr.mxu0 0.0
    %588 = vmatpush1.xpose.msra.mxu0 %v575
    %589 = vmatprep.subr.mxu0 0.0
    %590 = vmatpush1.xpose.msra.mxu0 %v577
    %591 = vmatprep.subr.mxu0 0.0
    %592 = vmatpush1.xpose.msra.mxu0 %v579
    %593 = vmatprep.subr.mxu0 0.0
    %594 = vmatpush1.xpose.msra.mxu0 0.0
    %595 = vmatprep.subr.mxu0 0.0
    %596 = vmatpush1.xpose.msra.mxu0 0.0
    %597 = vmatprep.subr.mxu0 0.0
    %598 = vmatpush1.xpose.msra.mxu0 0.0
    %599 = vmatprep.subr.mxu0 0.0
    %600 = vmatpush1.xpose.msra.mxu0 0.0
    %601 = vmatprep.subr.mxu0 0.0
    %602 = vmatpush1.xpose.msra.mxu0 0.0
    %603 = vmatprep.subr.mxu0 0.0
    %604 = vmatpush1.xpose.msra.mxu0 0.0
    %605 = vmatprep.subr.mxu0 0.0
    %606 = vmatpush1.xpose.msra.mxu0 0.0
    %607 = vmatprep.subr.mxu0 0.0
    %608 = vmatpush1.xpose.msra.mxu0 0.0
    %609 = vmatprep.subr.mxu0 0.0
    %610 = vmatpush1.xpose.msra.mxu0 0.0
    %611 = vmatprep.subr.mxu0 0.0
    %612 = vmatpush1.xpose.msra.mxu0 0.0
    %613 = vmatprep.subr.mxu0 0.0
    %614 = vmatpush1.xpose.msra.mxu0 0.0
    %615 = vmatprep.subr.mxu0 0.0
    %616 = vmatpush1.xpose.msra.mxu0 0.0
    %617 = vmatprep.subr.mxu0 0.0
    %618 = vmatpush1.xpose.msra.mxu0 0.0
    %619 = vmatprep.subr.mxu0 0.0
    %620 = vmatpush1.xpose.msra.mxu0 0.0
    %621 = vmatprep.subr.mxu0 0.0
    %622 = vmatpush1.xpose.msra.mxu0 0.0
    %623 = vmatprep.subr.mxu0 0.0
    %624 = vmatpush1.xpose.msra.mxu0 0.0
    %625 = vmatprep.subr.mxu0 0.0
    %626 = vmatpush1.xpose.msra.mxu0 0.0
    %627 = vmatprep.subr.mxu0 0.0
    %628 = vmatpush1.xpose.msra.mxu0 0.0
    %629 = vmatprep.subr.mxu0 0.0
    %630 = vmatpush1.xpose.msra.mxu0 0.0
    %631 = vmatprep.subr.mxu0 0.0
    %632 = vmatpush1.xpose.msra.mxu0 0.0
    %633 = vmatprep.subr.mxu0 0.0
    %634 = vmatpush1.xpose.msra.mxu0 0.0
    %635 = vmatprep.subr.mxu0 0.0
    %636 = vmatpush1.xpose.msra.mxu0 0.0
    %637 = vmatprep.subr.mxu0 0.0
    %638 = vmatpush1.xpose.msra.mxu0 0.0
    %639 = vmatprep.subr.mxu0 0.0
    %640 = vmatpush1.xpose.msra.mxu0 0.0
    %641 = vmatprep.subr.mxu0 0.0
    %642 = vmatpush1.xpose.msra.mxu0 0.0
    %643 = vmatprep.subr.mxu0 0.0
    %644 = vmatpush1.xpose.msra.mxu0 0.0
    %645 = vmatprep.mubr.f32.mxu0 0.0
    %646 = vmatmul.mubr.f32.gmra.mrb[0].mxu0 %v534
    %v647 = vpop.f32.mrb[0].mxu0
    %v648 = vadd.f32 0.0, %v647
    %v649 = vpop.f32.mrb[0].mxu0
    %650 = vmatprep.mubr.f32.mxu0 0.0
    %651 = vmatmul.mubr.f32.gmra.mrb[0].mxu0 %v537
    %v652 = vpop.f32.mrb[0].mxu0
    %v653 = vadd.f32 0.0, %v652
    %v654 = vpop.f32.mrb[0].mxu0
    %655 = vmatprep.mubr.f32.mxu0 0.0
    %656 = vmatmul.mubr.f32.gmra.mrb[0].mxu0 %v540
    %v657 = vpop.f32.mrb[0].mxu0
    %v658 = vadd.f32 0.0, %v657
    %v659 = vpop.f32.mrb[0].mxu0
    %660 = vmatprep.mubr.f32.mxu0 0.0
    %661 = vmatmul.mubr.f32.gmra.mrb[0].mxu0 %v543
    %v662 = vpop.f32.mrb[0].mxu0
    %v663 = vadd.f32 0.0, %v662
    %v664 = vpop.f32.mrb[0].mxu0
    %665 = vmatprep.mubr.f32.mxu0 0.0
    %666 = vmatmul.mubr.f32.gmra.mrb[0].mxu0 %v546
    %v667 = vpop.f32.mrb[0].mxu0
    %v668 = vadd.f32 0.0, %v667
    %v669 = vpop.f32.mrb[0].mxu0
    %670 = vmatprep.mubr.f32.mxu0 0.0
    %671 = vmatmul.mubr.f32.gmra.mrb[0].mxu0 %v549
    %v672 = vpop.f32.mrb[0].mxu0
    %v673 = vadd.f32 0.0, %v672
    %v674 = vpop.f32.mrb[0].mxu0
    %675 = vmatprep.mubr.f32.mxu0 0.0
    %676 = vmatmul.mubr.f32.gmra.mrb[0].mxu0 %v552
    %v677 = vpop.f32.mrb[0].mxu0
    %v678 = vadd.f32 0.0, %v677
    %v679 = vpop.f32.mrb[0].mxu0
    %680 = vmatprep.mubr.f32.mxu0 0.0
    %681 = vmatmul.mubr.f32.gmra.mrb[0].mxu0 %v555
    %v682 = vpop.f32.mrb[0].mxu0
    %v683 = vadd.f32 0.0, %v682
    %v684 = vpop.f32.mrb[0].mxu0
    %685 = vmatprep.mubr.f32.mxu0 0.0
    %686 = vmatmul.mubr.f32.gmra.mrb[0].mxu0 %v558
    %v687 = vpop.f32.mrb[0].mxu0
    %v688 = vadd.f32 0.0, %v687
    %v689 = vpop.f32.mrb[0].mxu0
    %690 = vmatprep.mubr.f32.mxu0 0.0
    %691 = vmatmul.mubr.f32.gmra.mrb[0].mxu0 %v561
    %v692 = vpop.f32.mrb[0].mxu0
    %v693 = vadd.f32 0.0, %v692
    %v694 = vpop.f32.mrb[0].mxu0
    %695 = vmatprep.mubr.f32.mxu0 0.0
    %696 = vmatmul.mubr.f32.gmra.mrb[0].mxu0 %v564
    %v697 = vpop.f32.mrb[0].mxu0
    %v698 = vadd.f32 0.0, %v697
    %v699 = vpop.f32.mrb[0].mxu0
    %700 = vmatprep.mubr.f32.mxu0 0.0
    %701 = vmatmul.mubr.f32.gmra.mrb[0].mxu0 %v567
    %v702 = vpop.f32.mrb[0].mxu0
    %v703 = vadd.f32 0.0, %v702
    %v704 = vpop.f32.mrb[0].mxu0
    %705 = vdwg.mxu0
    %707 = vset.pattern.permute.xlu0 0
    %708 = vperm.xlu0 %707, %v46
    %v709 = vpop.permute.xlu0 %708
    %712 = vset.pattern.permute.xlu0 0
    %713 = vperm.xlu0 %712, %v47
    %v714 = vpop.permute.xlu0 %713
    %717 = vset.pattern.permute.xlu0 0
    %718 = vperm.xlu0 %717, %v48
    %v719 = vpop.permute.xlu0 %718
    %722 = vset.pattern.permute.xlu0 0
    %723 = vperm.xlu0 %722, %v49
    %v724 = vpop.permute.xlu0 %723
    %727 = vset.pattern.permute.xlu0 0
    %728 = vperm.xlu0 %727, %v50
    %v729 = vpop.permute.xlu0 %728
    %732 = vset.pattern.permute.xlu0 0
    %733 = vperm.xlu0 %732, %v51
    %v734 = vpop.permute.xlu0 %733
    %737 = vset.pattern.permute.xlu0 0
    %738 = vperm.xlu0 %737, %v52
    %v739 = vpop.permute.xlu0 %738
    %742 = vset.pattern.permute.xlu0 0
    %743 = vperm.xlu0 %742, %v53
    %v744 = vpop.permute.xlu0 %743
    %747 = vset.pattern.permute.xlu0 0
    %748 = vperm.xlu0 %747, %v54
    %v749 = vpop.permute.xlu0 %748
    %752 = vset.pattern.permute.xlu0 0
    %753 = vperm.xlu0 %752, %v55
    %v754 = vpop.permute.xlu0 %753
    %757 = vset.pattern.permute.xlu0 0
    %758 = vperm.xlu0 %757, %v56
    %v759 = vpop.permute.xlu0 %758
    %762 = vset.pattern.permute.xlu0 0
    %763 = vperm.xlu0 %762, %v57
    %v764 = vpop.permute.xlu0 %763
    %v766 = vlaneseq
    %v767 = vshrl.u32 %v766, 7
    %v768 = vsub.s32 0, %v767
    %v769 = vrot.slane %v45, %v768
    %vm770 = vcmp.ne.f32.partialorder %v709, %v769
    %vm771 = vcmp.ne.f32.partialorder %v714, %v769
    %vm772 = vcmp.ne.f32.partialorder %v719, %v769
    %vm773 = vcmp.ne.f32.partialorder %v724, %v769
    %vm774 = vcmp.ne.f32.partialorder %v729, %v769
    %vm775 = vcmp.ne.f32.partialorder %v734, %v769
    %vm776 = vcmp.ne.f32.partialorder %v739, %v769
    %vm777 = vcmp.ne.f32.partialorder %v744, %v769
    %vm778 = vcmp.ne.f32.partialorder %v749, %v769
    %vm779 = vcmp.ne.f32.partialorder %v754, %v769
    %vm780 = vcmp.ne.f32.partialorder %v759, %v769
    %vm781 = vcmp.ne.f32.partialorder %v764, %v769
    %vm782 = vcmp.ne.f32.partialorder %v45, 0.0
    %v783 = vsel %vm782, 1, 0
    %v784 = vlaneseq
    %v785 = vshrl.u32 %v784, 7
    %v786 = vsub.s32 1, %v785
    %v787 = vrot.slane %v783, %v786
    %vm788 = vcmp.eq.s32.totalorder %v787, 1
    %vm789 = vmor %vm770, %vm788
    %vm790 = vmor %vm771, %vm788
    %vm791 = vmor %vm772, %vm788
    %vm792 = vmor %vm773, %vm788
    %vm793 = vmor %vm774, %vm788
    %vm794 = vmor %vm775, %vm788
    %vm795 = vmor %vm776, %vm788
    %vm796 = vmor %vm777, %vm788
    %vm797 = vmor %vm778, %vm788
    %vm798 = vmor %vm779, %vm788
    %vm799 = vmor %vm780, %vm788
    %vm800 = vmor %vm781, %vm788
    %v801 = vsel %vm789, -inf, %v648
    %v802 = vsel %vm790, -inf, %v653
    %v803 = vsel %vm791, -inf, %v658
    %v804 = vsel %vm792, -inf, %v663
    %v805 = vsel %vm793, -inf, %v668
    %v806 = vsel %vm794, -inf, %v673
    %v807 = vsel %vm795, -inf, %v678
    %v808 = vsel %vm796, -inf, %v683
    %v809 = vsel %vm797, -inf, %v688
    %v810 = vsel %vm798, -inf, %v693
    %v811 = vsel %vm799, -inf, %v698
    %v812 = vsel %vm800, -inf, %v703
    %v813 = vsel %vm328, %v801, -inf
    %814 = vmax.xlane.f32.xlu0 %v813
    %v815 = vpop.xlane.xlu0 %814
    %v816 = vsel %vm328, %v802, -inf
    %817 = vmax.xlane.f32.xlu0 %v816
    %v818 = vpop.xlane.xlu0 %817
    %v819 = vsel %vm328, %v803, -inf
    %820 = vmax.xlane.f32.xlu0 %v819
    %v821 = vpop.xlane.xlu0 %820
    %v822 = vsel %vm328, %v804, -inf
    %823 = vmax.xlane.f32.xlu0 %v822
    %v824 = vpop.xlane.xlu0 %823
    %v825 = vsel %vm328, %v805, -inf
    %826 = vmax.xlane.f32.xlu0 %v825
    %v827 = vpop.xlane.xlu0 %826
    %v828 = vsel %vm328, %v806, -inf
    %829 = vmax.xlane.f32.xlu0 %v828
    %v830 = vpop.xlane.xlu0 %829
    %v831 = vsel %vm328, %v807, -inf
    %832 = vmax.xlane.f32.xlu0 %v831
    %v833 = vpop.xlane.xlu0 %832
    %v834 = vsel %vm328, %v808, -inf
    %835 = vmax.xlane.f32.xlu0 %v834
    %v836 = vpop.xlane.xlu0 %835
    %v837 = vsel %vm328, %v809, -inf
    %838 = vmax.xlane.f32.xlu0 %v837
    %v839 = vpop.xlane.xlu0 %838
    %v840 = vsel %vm328, %v810, -inf
    %841 = vmax.xlane.f32.xlu0 %v840
    %v842 = vpop.xlane.xlu0 %841
    %v843 = vsel %vm328, %v811, -inf
    %844 = vmax.xlane.f32.xlu0 %v843
    %v845 = vpop.xlane.xlu0 %844
    %v846 = vsel %vm328, %v812, -inf
    %847 = vmax.xlane.f32.xlu0 %v846
    %v848 = vpop.xlane.xlu0 %847
    %vm849 = vcmp.eq.f32.partialorder %v815, -inf
    %vm850 = vcmp.eq.f32.partialorder %v818, -inf
    %vm851 = vcmp.eq.f32.partialorder %v821, -inf
    %vm852 = vcmp.eq.f32.partialorder %v824, -inf
    %vm853 = vcmp.eq.f32.partialorder %v827, -inf
    %vm854 = vcmp.eq.f32.partialorder %v830, -inf
    %vm855 = vcmp.eq.f32.partialorder %v833, -inf
    %vm856 = vcmp.eq.f32.partialorder %v836, -inf
    %vm857 = vcmp.eq.f32.partialorder %v839, -inf
    %vm858 = vcmp.eq.f32.partialorder %v842, -inf
    %vm859 = vcmp.eq.f32.partialorder %v845, -inf
    %vm860 = vcmp.eq.f32.partialorder %v848, -inf
    %v861 = vsel %vm849, 0.0, %v815
    %v862 = vsel %vm850, 0.0, %v818
    %v863 = vsel %vm851, 0.0, %v821
    %v864 = vsel %vm852, 0.0, %v824
    %v865 = vsel %vm853, 0.0, %v827
    %v866 = vsel %vm854, 0.0, %v830
    %v867 = vsel %vm855, 0.0, %v833
    %v868 = vsel %vm856, 0.0, %v836
    %v869 = vsel %vm857, 0.0, %v839
    %v870 = vsel %vm858, 0.0, %v842
    %v871 = vsel %vm859, 0.0, %v845
    %v872 = vsel %vm860, 0.0, %v848
    %v873 = vsub.f32 %v801, %v861
    %v874 = vsub.f32 %v802, %v862
    %v875 = vsub.f32 %v803, %v863
    %v876 = vsub.f32 %v804, %v864
    %v877 = vsub.f32 %v805, %v865
    %v878 = vsub.f32 %v806, %v866
    %v879 = vsub.f32 %v807, %v867
    %v880 = vsub.f32 %v808, %v868
    %v881 = vsub.f32 %v809, %v869
    %v882 = vsub.f32 %v810, %v870
    %v883 = vsub.f32 %v811, %v871
    %v884 = vsub.f32 %v812, %v872
    %v885 = vmul.f32 %v873, 1.442695
    %v886 = vpow.pop %v885
    %v887 = vmul.f32 %v874, 1.442695
    %v888 = vpow.pop %v887
    %v889 = vmul.f32 %v875, 1.442695
    %v890 = vpow.pop %v889
    %v891 = vmul.f32 %v876, 1.442695
    %v892 = vpow.pop %v891
    %v893 = vmul.f32 %v877, 1.442695
    %v894 = vpow.pop %v893
    %v895 = vmul.f32 %v878, 1.442695
    %v896 = vpow.pop %v895
    %v897 = vmul.f32 %v879, 1.442695
    %v898 = vpow.pop %v897
    %v899 = vmul.f32 %v880, 1.442695
    %v900 = vpow.pop %v899
    %v901 = vmul.f32 %v881, 1.442695
    %v902 = vpow.pop %v901
    %v903 = vmul.f32 %v882, 1.442695
    %v904 = vpow.pop %v903
    %v905 = vmul.f32 %v883, 1.442695
    %v906 = vpow.pop %v905
    %v907 = vmul.f32 %v884, 1.442695
    %v908 = vpow.pop %v907
    %v909 = vsel %vm328, %v886, 0.0
    %910 = vadd.xlane.f32.xlu0 %v909
    %v911 = vpop.xlane.xlu0 %910
    %v912 = vsel %vm328, %v888, 0.0
    %913 = vadd.xlane.f32.xlu0 %v912
    %v914 = vpop.xlane.xlu0 %913
    %v915 = vsel %vm328, %v890, 0.0
    %916 = vadd.xlane.f32.xlu0 %v915
    %v917 = vpop.xlane.xlu0 %916
    %v918 = vsel %vm328, %v892, 0.0
    %919 = vadd.xlane.f32.xlu0 %v918
    %v920 = vpop.xlane.xlu0 %919
    %v921 = vsel %vm328, %v894, 0.0
    %922 = vadd.xlane.f32.xlu0 %v921
    %v923 = vpop.xlane.xlu0 %922
    %v924 = vsel %vm328, %v896, 0.0
    %925 = vadd.xlane.f32.xlu0 %v924
    %v926 = vpop.xlane.xlu0 %925
    %v927 = vsel %vm328, %v898, 0.0
    %928 = vadd.xlane.f32.xlu0 %v927
    %v929 = vpop.xlane.xlu0 %928
    %v930 = vsel %vm328, %v900, 0.0
    %931 = vadd.xlane.f32.xlu0 %v930
    %v932 = vpop.xlane.xlu0 %931
    %v933 = vsel %vm328, %v902, 0.0
    %934 = vadd.xlane.f32.xlu0 %v933
    %v935 = vpop.xlane.xlu0 %934
    %v936 = vsel %vm328, %v904, 0.0
    %937 = vadd.xlane.f32.xlu0 %v936
    %v938 = vpop.xlane.xlu0 %937
    %v939 = vsel %vm328, %v906, 0.0
    %940 = vadd.xlane.f32.xlu0 %v939
    %v941 = vpop.xlane.xlu0 %940
    %v942 = vsel %vm328, %v908, 0.0
    %943 = vadd.xlane.f32.xlu0 %v942
    %v944 = vpop.xlane.xlu0 %943
    %vm945 = vcmp.gt.f32.partialorder %v911, 0.0
    %vm946 = vcmp.gt.f32.partialorder %v914, 0.0
    %vm947 = vcmp.gt.f32.partialorder %v917, 0.0
    %vm948 = vcmp.gt.f32.partialorder %v920, 0.0
    %vm949 = vcmp.gt.f32.partialorder %v923, 0.0
    %vm950 = vcmp.gt.f32.partialorder %v926, 0.0
    %vm951 = vcmp.gt.f32.partialorder %v929, 0.0
    %vm952 = vcmp.gt.f32.partialorder %v932, 0.0
    %vm953 = vcmp.gt.f32.partialorder %v935, 0.0
    %vm954 = vcmp.gt.f32.partialorder %v938, 0.0
    %vm955 = vcmp.gt.f32.partialorder %v941, 0.0
    %vm956 = vcmp.gt.f32.partialorder %v944, 0.0
    %v957 = vsel %vm945, %v911, 1.0
    %v958 = vsel %vm946, %v914, 1.0
    %v959 = vsel %vm947, %v917, 1.0
    %v960 = vsel %vm948, %v920, 1.0
    %v961 = vsel %vm949, %v923, 1.0
    %v962 = vsel %vm950, %v926, 1.0
    %v963 = vsel %vm951, %v929, 1.0
    %v964 = vsel %vm952, %v932, 1.0
    %v965 = vsel %vm953, %v935, 1.0
    %v966 = vsel %vm954, %v938, 1.0
    %v967 = vsel %vm955, %v941, 1.0
    %v968 = vsel %vm956, %v944, 1.0
    %v969 = vrcp.pop %v957
    %v970 = vrcp.pop %v958
    %v971 = vrcp.pop %v959
    %v972 = vrcp.pop %v960
    %v973 = vrcp.pop %v961
    %v974 = vrcp.pop %v962
    %v975 = vrcp.pop %v963
    %v976 = vrcp.pop %v964
    %v977 = vrcp.pop %v965
    %v978 = vrcp.pop %v966
    %v979 = vrcp.pop %v967
    %v980 = vrcp.pop %v968
    %v981 = vmul.f32 %v886, %v969
    %v982 = vmul.f32 %v888, %v970
    %v983 = vmul.f32 %v890, %v971
    %v984 = vmul.f32 %v892, %v972
    %v985 = vmul.f32 %v894, %v973
    %v986 = vmul.f32 %v896, %v974
    %v987 = vmul.f32 %v898, %v975
    %v988 = vmul.f32 %v900, %v976
    %v989 = vmul.f32 %v902, %v977
    %v990 = vmul.f32 %v904, %v978
    %v991 = vmul.f32 %v906, %v979
    %v992 = vmul.f32 %v908, %v980
    %999 = vrot.lane.b32.xlu0 %v310, 64
    %v1000 = vpop.permute.xlu0 %999
    %1001 = vrot.lane.b32.xlu0 %v311, 64
    %v1002 = vpop.permute.xlu0 %1001
    %1003 = vrot.lane.b32.xlu0 %v312, 64
    %v1004 = vpop.permute.xlu0 %1003
    %1005 = vrot.lane.b32.xlu0 %v313, 64
    %v1006 = vpop.permute.xlu0 %1005
    %1007 = vrot.lane.b32.xlu0 %v314, 64
    %v1008 = vpop.permute.xlu0 %1007
    %1009 = vrot.lane.b32.xlu0 %v315, 64
    %v1010 = vpop.permute.xlu0 %1009
    %v1018 = vsel %vm328, %v981, 0
    %v1021 = vsel %vm328, %v982, 0
    %v1024 = vsel %vm328, %v983, 0
    %v1027 = vsel %vm328, %v984, 0
    %v1030 = vsel %vm328, %v985, 0
    %v1033 = vsel %vm328, %v986, 0
    %v1036 = vsel %vm328, %v987, 0
    %v1039 = vsel %vm328, %v988, 0
    %v1042 = vsel %vm328, %v989, 0
    %v1045 = vsel %vm328, %v990, 0
    %v1048 = vsel %vm328, %v991, 0
    %v1051 = vsel %vm328, %v992, 0
    %1053 = vmatprep.subr.mxu0 0.0
    %1054 = vmatpush1.msra.mxu0 %v1000
    %1055 = vmatprep.subr.mxu0 0.0
    %1056 = vmatpush1.msra.mxu0 %v1002
    %1057 = vmatprep.subr.mxu0 0.0
    %1058 = vmatpush1.msra.mxu0 %v1004
    %1059 = vmatprep.subr.mxu0 0.0
    %1060 = vmatpush1.msra.mxu0 %v1006
    %1061 = vmatprep.subr.mxu0 0.0
    %1062 = vmatpush1.msra.mxu0 %v1008
    %1063 = vmatprep.subr.mxu0 0.0
    %1064 = vmatpush1.msra.mxu0 %v1010
    %1065 = vmatprep.subr.mxu0 0.0
    %1066 = vmatpush1.msra.mxu0 0.0
    %1067 = vmatprep.subr.mxu0 0.0
    %1068 = vmatpush1.msra.mxu0 0.0
    %1069 = vmatprep.subr.mxu0 0.0
    %1070 = vmatpush1.msra.mxu0 0.0
    %1071 = vmatprep.subr.mxu0 0.0
    %1072 = vmatpush1.msra.mxu0 0.0
    %1073 = vmatprep.subr.mxu0 0.0
    %1074 = vmatpush1.msra.mxu0 0.0
    %1075 = vmatprep.subr.mxu0 0.0
    %1076 = vmatpush1.msra.mxu0 0.0
    %1077 = vmatprep.subr.mxu0 0.0
    %1078 = vmatpush1.msra.mxu0 0.0
    %1079 = vmatprep.subr.mxu0 0.0
    %1080 = vmatpush1.msra.mxu0 0.0
    %1081 = vmatprep.subr.mxu0 0.0
    %1082 = vmatpush1.msra.mxu0 0.0
    %1083 = vmatprep.subr.mxu0 0.0
    %1084 = vmatpush1.msra.mxu0 0.0
    %1085 = vmatprep.subr.mxu0 0.0
    %1086 = vmatpush1.msra.mxu0 0.0
    %1087 = vmatprep.subr.mxu0 0.0
    %1088 = vmatpush1.msra.mxu0 0.0
    %1089 = vmatprep.subr.mxu0 0.0
    %1090 = vmatpush1.msra.mxu0 0.0
    %1091 = vmatprep.subr.mxu0 0.0
    %1092 = vmatpush1.msra.mxu0 0.0
    %1093 = vmatprep.subr.mxu0 0.0
    %1094 = vmatpush1.msra.mxu0 0.0
    %1095 = vmatprep.subr.mxu0 0.0
    %1096 = vmatpush1.msra.mxu0 0.0
    %1097 = vmatprep.subr.mxu0 0.0
    %1098 = vmatpush1.msra.mxu0 0.0
    %1099 = vmatprep.subr.mxu0 0.0
    %1100 = vmatpush1.msra.mxu0 0.0
    %1101 = vmatprep.subr.mxu0 0.0
    %1102 = vmatpush1.msra.mxu0 0.0
    %1103 = vmatprep.subr.mxu0 0.0
    %1104 = vmatpush1.msra.mxu0 0.0
    %1105 = vmatprep.subr.mxu0 0.0
    %1106 = vmatpush1.msra.mxu0 0.0
    %1107 = vmatprep.subr.mxu0 0.0
    %1108 = vmatpush1.msra.mxu0 0.0
    %1109 = vmatprep.subr.mxu0 0.0
    %1110 = vmatpush1.msra.mxu0 0.0
    %1111 = vmatprep.subr.mxu0 0.0
    %1112 = vmatpush1.msra.mxu0 0.0
    %1113 = vmatprep.subr.mxu0 0.0
    %1114 = vmatpush1.msra.mxu0 0.0
    %1115 = vmatprep.subr.mxu0 0.0
    %1116 = vmatpush1.msra.mxu0 0.0
    %1117 = vmatprep.mubr.f32.mxu0 0.0
    %1118 = vmatmul.mubr.f32.gmra.mrb[0].mxu0 %v1018
    %v1119 = vpop.f32.mrb[0].mxu0
    %v1120 = vadd.f32 0.0, %v1119
    %v1121 = vpop.f32.mrb[0].mxu0
    %1122 = vmatprep.mubr.f32.mxu0 0.0
    %1123 = vmatmul.mubr.f32.gmra.mrb[0].mxu0 %v1021
    %v1124 = vpop.f32.mrb[0].mxu0
    %v1125 = vadd.f32 0.0, %v1124
    %v1126 = vpop.f32.mrb[0].mxu0
    %1127 = vmatprep.mubr.f32.mxu0 0.0
    %1128 = vmatmul.mubr.f32.gmra.mrb[0].mxu0 %v1024
    %v1129 = vpop.f32.mrb[0].mxu0
    %v1130 = vadd.f32 0.0, %v1129
    %v1131 = vpop.f32.mrb[0].mxu0
    %1132 = vmatprep.mubr.f32.mxu0 0.0
    %1133 = vmatmul.mubr.f32.gmra.mrb[0].mxu0 %v1027
    %v1134 = vpop.f32.mrb[0].mxu0
    %v1135 = vadd.f32 0.0, %v1134
    %v1136 = vpop.f32.mrb[0].mxu0
    %1137 = vmatprep.mubr.f32.mxu0 0.0
    %1138 = vmatmul.mubr.f32.gmra.mrb[0].mxu0 %v1030
    %v1139 = vpop.f32.mrb[0].mxu0
    %v1140 = vadd.f32 0.0, %v1139
    %v1141 = vpop.f32.mrb[0].mxu0
    %1142 = vmatprep.mubr.f32.mxu0 0.0
    %1143 = vmatmul.mubr.f32.gmra.mrb[0].mxu0 %v1033
    %v1144 = vpop.f32.mrb[0].mxu0
    %v1145 = vadd.f32 0.0, %v1144
    %v1146 = vpop.f32.mrb[0].mxu0
    %1147 = vmatprep.mubr.f32.mxu0 0.0
    %1148 = vmatmul.mubr.f32.gmra.mrb[0].mxu0 %v1036
    %v1149 = vpop.f32.mrb[0].mxu0
    %v1150 = vadd.f32 0.0, %v1149
    %v1151 = vpop.f32.mrb[0].mxu0
    %1152 = vmatprep.mubr.f32.mxu0 0.0
    %1153 = vmatmul.mubr.f32.gmra.mrb[0].mxu0 %v1039
    %v1154 = vpop.f32.mrb[0].mxu0
    %v1155 = vadd.f32 0.0, %v1154
    %v1156 = vpop.f32.mrb[0].mxu0
    %1157 = vmatprep.mubr.f32.mxu0 0.0
    %1158 = vmatmul.mubr.f32.gmra.mrb[0].mxu0 %v1042
    %v1159 = vpop.f32.mrb[0].mxu0
    %v1160 = vadd.f32 0.0, %v1159
    %v1161 = vpop.f32.mrb[0].mxu0
    %1162 = vmatprep.mubr.f32.mxu0 0.0
    %1163 = vmatmul.mubr.f32.gmra.mrb[0].mxu0 %v1045
    %v1164 = vpop.f32.mrb[0].mxu0
    %v1165 = vadd.f32 0.0, %v1164
    %v1166 = vpop.f32.mrb[0].mxu0
    %1167 = vmatprep.mubr.f32.mxu0 0.0
    %1168 = vmatmul.mubr.f32.gmra.mrb[0].mxu0 %v1048
    %v1169 = vpop.f32.mrb[0].mxu0
    %v1170 = vadd.f32 0.0, %v1169
    %v1171 = vpop.f32.mrb[0].mxu0
    %1172 = vmatprep.mubr.f32.mxu0 0.0
    %1173 = vmatmul.mubr.f32.gmra.mrb[0].mxu0 %v1051
    %v1174 = vpop.f32.mrb[0].mxu0
    %v1175 = vadd.f32 0.0, %v1174
    %v1176 = vpop.f32.mrb[0].mxu0
    %1177 = vdwg.mxu0
    %v1178 = vmul.f32 %v1120, %v490
    %v1179 = vmul.f32 %v1125, %v491
    %v1180 = vmul.f32 %v1130, %v492
    %v1181 = vmul.f32 %v1135, %v493
    %v1182 = vmul.f32 %v1140, %v494
    %v1183 = vmul.f32 %v1145, %v495
    %v1184 = vmul.f32 %v1150, %v496
    %v1185 = vmul.f32 %v1155, %v497
    %v1186 = vmul.f32 %v1160, %v498
    %v1187 = vmul.f32 %v1165, %v499
    %v1188 = vmul.f32 %v1170, %v500
    %v1189 = vmul.f32 %v1175, %v501
    %v1190 = vld [vmem:[%s10] sm:$0xff]
    %v1191 = vld [vmem:[%s10 + $0x8] sm:$0xff]
    %v1192 = vld [vmem:[%s10 + $0x10] sm:$0xff]
    %vm1193 = vcmask 785408
    %v1195 = vsel %vm1193, %v1190, 0
    %v1198 = vsel %vm1193, %v1191, 0
    %v1201 = vsel %vm1193, %v1192, 0
    %1203 = vmatprep.subr.mxu0 0.0
    %1204 = vmatpush1.msra.mxu0 %v1178
    %1205 = vmatprep.subr.mxu0 0.0
    %1206 = vmatpush1.msra.mxu0 %v1179
    %1207 = vmatprep.subr.mxu0 0.0
    %1208 = vmatpush1.msra.mxu0 %v1180
    %1209 = vmatprep.subr.mxu0 0.0
    %1210 = vmatpush1.msra.mxu0 %v1181
    %1211 = vmatprep.subr.mxu0 0.0
    %1212 = vmatpush1.msra.mxu0 %v1182
    %1213 = vmatprep.subr.mxu0 0.0
    %1214 = vmatpush1.msra.mxu0 %v1183
    %1215 = vmatprep.subr.mxu0 0.0
    %1216 = vmatpush1.msra.mxu0 %v1184
    %1217 = vmatprep.subr.mxu0 0.0
    %1218 = vmatpush1.msra.mxu0 %v1185
    %1219 = vmatprep.subr.mxu0 0.0
    %1220 = vmatpush1.msra.mxu0 %v1186
    %1221 = vmatprep.subr.mxu0 0.0
    %1222 = vmatpush1.msra.mxu0 %v1187
    %1223 = vmatprep.subr.mxu0 0.0
    %1224 = vmatpush1.msra.mxu0 %v1188
    %1225 = vmatprep.subr.mxu0 0.0
    %1226 = vmatpush1.msra.mxu0 %v1189
    %1227 = vmatprep.subr.mxu0 0.0
    %1228 = vmatpush1.msra.mxu0 0.0
    %1229 = vmatprep.subr.mxu0 0.0
    %1230 = vmatpush1.msra.mxu0 0.0
    %1231 = vmatprep.subr.mxu0 0.0
    %1232 = vmatpush1.msra.mxu0 0.0
    %1233 = vmatprep.subr.mxu0 0.0
    %1234 = vmatpush1.msra.mxu0 0.0
    %1235 = vmatprep.subr.mxu0 0.0
    %1236 = vmatpush1.msra.mxu0 0.0
    %1237 = vmatprep.subr.mxu0 0.0
    %1238 = vmatpush1.msra.mxu0 0.0
    %1239 = vmatprep.subr.mxu0 0.0
    %1240 = vmatpush1.msra.mxu0 0.0
    %1241 = vmatprep.subr.mxu0 0.0
    %1242 = vmatpush1.msra.mxu0 0.0
    %1243 = vmatprep.subr.mxu0 0.0
    %1244 = vmatpush1.msra.mxu0 0.0
    %1245 = vmatprep.subr.mxu0 0.0
    %1246 = vmatpush1.msra.mxu0 0.0
    %1247 = vmatprep.subr.mxu0 0.0
    %1248 = vmatpush1.msra.mxu0 0.0
    %1249 = vmatprep.subr.mxu0 0.0
    %1250 = vmatpush1.msra.mxu0 0.0
    %1251 = vmatprep.subr.mxu0 0.0
    %1252 = vmatpush1.msra.mxu0 0.0
    %1253 = vmatprep.subr.mxu0 0.0
    %1254 = vmatpush1.msra.mxu0 0.0
    %1255 = vmatprep.subr.mxu0 0.0
    %1256 = vmatpush1.msra.mxu0 0.0
    %1257 = vmatprep.subr.mxu0 0.0
    %1258 = vmatpush1.msra.mxu0 0.0
    %1259 = vmatprep.subr.mxu0 0.0
    %1260 = vmatpush1.msra.mxu0 0.0
    %1261 = vmatprep.subr.mxu0 0.0
    %1262 = vmatpush1.msra.mxu0 0.0
    %1263 = vmatprep.subr.mxu0 0.0
    %1264 = vmatpush1.msra.mxu0 0.0
    %1265 = vmatprep.subr.mxu0 0.0
    %1266 = vmatpush1.msra.mxu0 0.0
    %1267 = vmatprep.mubr.f32.mxu0 0.0
    %1268 = vmatmul.mubr.f32.gmra.mrb[0].mxu0 %v1195
    %v1269 = vpop.f32.mrb[0].mxu0
    %v1270 = vadd.f32 0.0, %v1269
    %v1271 = vpop.f32.mrb[0].mxu0
    %1272 = vmatprep.mubr.f32.mxu0 0.0
    %1273 = vmatmul.mubr.f32.gmra.mrb[0].mxu0 %v1198
    %v1274 = vpop.f32.mrb[0].mxu0
    %v1275 = vadd.f32 0.0, %v1274
    %v1276 = vpop.f32.mrb[0].mxu0
    %1277 = vmatprep.mubr.f32.mxu0 0.0
    %1278 = vmatmul.mubr.f32.gmra.mrb[0].mxu0 %v1201
    %v1279 = vpop.f32.mrb[0].mxu0
    %v1280 = vadd.f32 0.0, %v1279
    %v1281 = vpop.f32.mrb[0].mxu0
    %1282 = vdwg.mxu0
    %v1283 = vld [vmem:[%s6] sm:$0xff]
    %v1284 = vld [vmem:[%s6 + $0x8] sm:$0xff]
    %v1285 = vld [vmem:[%s6 + $0x10] sm:$0xff]
    %v1286 = vld [vmem:[%s6 + $0x18] sm:$0xff]
    %v1287 = vld [vmem:[%s7] sm:$0x1]
    %v1289 = vlaneseq
    %v1290 = vshrl.u32 %v1289, 7
    %v1291 = vsub.s32 0, %v1290
    %v1292 = vrot.slane %v1287, %v1291
    %v1295 = vsel %vm532, %v1270, 0
    %v1298 = vsel %vm532, %v1275, 0
    %v1301 = vsel %vm532, %v1280, 0
    %1303 = vmatprep.subr.mxu0 0.0
    %1304 = vmatpush1.msra.mxu0 %v1283
    %1305 = vmatprep.subr.mxu0 0.0
    %1306 = vmatpush1.msra.mxu0 %v1284
    %1307 = vmatprep.subr.mxu0 0.0
    %1308 = vmatpush1.msra.mxu0 %v1285
    %1309 = vmatprep.subr.mxu0 0.0
    %1310 = vmatpush1.msra.mxu0 %v1286
    %1311 = vmatprep.subr.mxu0 0.0
    %1312 = vmatpush1.msra.mxu0 0.0
    %1313 = vmatprep.subr.mxu0 0.0
    %1314 = vmatpush1.msra.mxu0 0.0
    %1315 = vmatprep.subr.mxu0 0.0
    %1316 = vmatpush1.msra.mxu0 0.0
    %1317 = vmatprep.subr.mxu0 0.0
    %1318 = vmatpush1.msra.mxu0 0.0
    %1319 = vmatprep.subr.mxu0 0.0
    %1320 = vmatpush1.msra.mxu0 0.0
    %1321 = vmatprep.subr.mxu0 0.0
    %1322 = vmatpush1.msra.mxu0 0.0
    %1323 = vmatprep.subr.mxu0 0.0
    %1324 = vmatpush1.msra.mxu0 0.0
    %1325 = vmatprep.subr.mxu0 0.0
    %1326 = vmatpush1.msra.mxu0 0.0
    %1327 = vmatprep.subr.mxu0 0.0
    %1328 = vmatpush1.msra.mxu0 0.0
    %1329 = vmatprep.subr.mxu0 0.0
    %1330 = vmatpush1.msra.mxu0 0.0
    %1331 = vmatprep.subr.mxu0 0.0
    %1332 = vmatpush1.msra.mxu0 0.0
    %1333 = vmatprep.subr.mxu0 0.0
    %1334 = vmatpush1.msra.mxu0 0.0
    %1335 = vmatprep.subr.mxu0 0.0
    %1336 = vmatpush1.msra.mxu0 0.0
    %1337 = vmatprep.subr.mxu0 0.0
    %1338 = vmatpush1.msra.mxu0 0.0
    %1339 = vmatprep.subr.mxu0 0.0
    %1340 = vmatpush1.msra.mxu0 0.0
    %1341 = vmatprep.subr.mxu0 0.0
    %1342 = vmatpush1.msra.mxu0 0.0
    %1343 = vmatprep.subr.mxu0 0.0
    %1344 = vmatpush1.msra.mxu0 0.0
    %1345 = vmatprep.subr.mxu0 0.0
    %1346 = vmatpush1.msra.mxu0 0.0
    %1347 = vmatprep.subr.mxu0 0.0
    %1348 = vmatpush1.msra.mxu0 0.0
    %1349 = vmatprep.subr.mxu0 0.0
    %1350 = vmatpush1.msra.mxu0 0.0
    %1351 = vmatprep.subr.mxu0 0.0
    %1352 = vmatpush1.msra.mxu0 0.0
    %1353 = vmatprep.subr.mxu0 0.0
    %1354 = vmatpush1.msra.mxu0 0.0
    %1355 = vmatprep.subr.mxu0 0.0
    %1356 = vmatpush1.msra.mxu0 0.0
    %1357 = vmatprep.subr.mxu0 0.0
    %1358 = vmatpush1.msra.mxu0 0.0
    %1359 = vmatprep.subr.mxu0 0.0
    %1360 = vmatpush1.msra.mxu0 0.0
    %1361 = vmatprep.subr.mxu0 0.0
    %1362 = vmatpush1.msra.mxu0 0.0
    %1363 = vmatprep.subr.mxu0 0.0
    %1364 = vmatpush1.msra.mxu0 0.0
    %1365 = vmatprep.subr.mxu0 0.0
    %1366 = vmatpush1.msra.mxu0 0.0
    %1367 = vmatprep.mubr.f32.mxu0 0.0
    %1368 = vmatmul.mubr.f32.gmra.mrb[0].mxu0 %v1295
    %v1369 = vpop.f32.mrb[0].mxu0
    %v1370 = vadd.f32 %v1292, %v1369
    %v1371 = vpop.f32.mrb[0].mxu0
    %1372 = vmatprep.mubr.f32.mxu0 0.0
    %1373 = vmatmul.mubr.f32.gmra.mrb[0].mxu0 %v1298
    %v1374 = vpop.f32.mrb[0].mxu0
    %v1375 = vadd.f32 %v1292, %v1374
    %v1376 = vpop.f32.mrb[0].mxu0
    %1377 = vmatprep.mubr.f32.mxu0 0.0
    %1378 = vmatmul.mubr.f32.gmra.mrb[0].mxu0 %v1301
    %v1379 = vpop.f32.mrb[0].mxu0
    %v1380 = vadd.f32 %v1292, %v1379
    %v1381 = vpop.f32.mrb[0].mxu0
    %1382 = vdwg.mxu0
    %vm1383 = vcmp.ne.f32.partialorder %v58, 0.0
    %vm1384 = vcmp.ne.f32.partialorder %v59, 0.0
    %vm1385 = vcmp.ne.f32.partialorder %v60, 0.0
    %v1386 = vsel %vm1383, 1, 0
    %v1387 = vsel %vm1384, 1, 0
    %v1388 = vsel %vm1385, 1, 0
    %1389 = vset.pattern.permute.xlu0 0
    %1390 = vperm.xlu0 %1389, %v1386
    %v1391 = vpop.permute.xlu0 %1390
    %1392 = vset.pattern.permute.xlu0 0
    %1393 = vperm.xlu0 %1392, %v1387
    %v1394 = vpop.permute.xlu0 %1393
    %1395 = vset.pattern.permute.xlu0 0
    %1396 = vperm.xlu0 %1395, %v1388
    %v1397 = vpop.permute.xlu0 %1396
    %vm1398 = vcmp.eq.s32.totalorder %v1391, 1
    %vm1399 = vcmp.eq.s32.totalorder %v1394, 1
    %vm1400 = vcmp.eq.s32.totalorder %v1397, 1
    %v1401 = vsel %vm1398, 0.0, %v1370
    %v1402 = vsel %vm1399, 0.0, %v1375
    %v1403 = vsel %vm1400, 0.0, %v1380
    %1404 = vst [vmem:[#allocation2] sm:$0xff] %v1401
    %1405 = vst [vmem:[#allocation2 + $0x8] sm:$0xff] %v1402
    %1406 = vst [vmem:[#allocation2 + $0x10] sm:$0xff] %v1403
    // Predicated region
    $region46: #{tpu_custom_call.1} parent=1 // pred_check
      _
    $region47: #{tpu_custom_call.1} parent=1 // pred_check_branch
      %1408 = sbr.rel (0) target = $region49
    $region48: #{tpu_custom_call.1} parent=1 // pred_region
      %s1410 = ssub.s32 384, 384
      %1411 = vsyncadd [#allocation3], %s1410
      %s1412 = sshll.u32 [#allocation2], 4
      %s1413 = int_to_ptr.vmem [resolvable:$true] %s1412
      %1418 = dma.vmem_to_hbm [thread:$0]  %s1413, 384, %s11, [#allocation3], 128, 128, 8
    $region49: #{tpu_custom_call.1} parent=1 // pred_fallthru
      _
    // Predicated region
    $region50: #{tpu_custom_call.1} parent=1 // pred_check
      _
    $region51: #{tpu_custom_call.1} parent=1 // pred_check_branch
      %1420 = sbr.rel (0) target = $region53
    $region52: #{tpu_custom_call.1} parent=1 // pred_region
      %1421 = dma.done [#allocation3], 384
    $region53: #{tpu_custom_call.1} parent=1 // pred_fallthru
      _
    %1422 = vsyncpa [#allocation3], 1

</llo_original>
